<compile_context>
chip_gen: v7x
topology: tpu7x:2x2x1
jax: 0.10.0
libtpu: 0.0.40
codegen_flags: <defaults>
</compile_context>

<pallas_src>
import functools

import numpy as np
import jax
import jax.numpy as jnp
from jax.experimental import pallas as pl
from jax.experimental.pallas import tpu as pltpu


def _round_up(x, m):
    return ((x + m - 1) // m) * m


# ----------------------------- Pallas kernel -------------------------------

def perceptual_kernel(img_ref, rule_ref,
                      wih_img_ref, wzf_ref, bin_ref,
                      whh_ref, bhh_ref,
                      wheads_ref, bheads_ref,
                      out_ref, preds_ref, *, T, Bb):
    """One batch block (Bb samples, Bb % 8 == 0), all T timesteps.

    2-D refs are time-major: row r = t * Bb + b_local, so the per-timestep
    slice xw[t*Bb:(t+1)*Bb] is a contiguous, sublane-aligned (Bb, H) tile.
    """
    H = whh_ref.shape[0]

    # ---- input projection for ALL timesteps at once -------------------------
    img = img_ref[...]                                      # (T*Bb, Dimg)
    rule = rule_ref[...]                                    # (T*Bb, 2)
    wzf = wzf_ref[...]                                      # (2, H)

    xw = jnp.dot(img, wih_img_ref[...],
                 preferred_element_type=jnp.float32)        # (T*Bb, H)
    # K=2 rule term as two VPU broadcast-FMAs (no MXU fill/drain for K=2).
    xw = xw + rule[:, 0:1] * wzf[0:1, :] + rule[:, 1:2] * wzf[1:2, :]
    xw = xw + bin_ref[...]                                  # fused bias

    # ---- Elman recurrence over the whole (Bb, H) batch per step -------------
    whh = whh_ref[...]                                      # hoisted, resident
    bhh = bhh_ref[...]
    h = jnp.zeros((Bb, H), jnp.float32)
    for t in range(T):                                      # T small & static
        h = jnp.tanh(xw[t * Bb:(t + 1) * Bb, :]
                     + jnp.dot(h, whh, preferred_element_type=jnp.float32)
                     + bhh)
        out_ref[t * Bb:(t + 1) * Bb, :] = h                 # dense (Bb,H) store
    # TODO(synk): for long T, switch to lax.fori_loop(unroll=k) and hold W_hh
    # in MXU weight registers via pltpu.matmul_push_rhs / matmul_acc_lhs.

    # ---- fused prediction heads: single (T*Bb, H) @ (H, 6) matmul ------------
    out_all = out_ref[...]
    logits = jnp.dot(out_all, wheads_ref[...],
                     preferred_element_type=jnp.float32) + bheads_ref[...]

    def softmax2(z):                                        # stable 2-class softmax
        m = jnp.max(z, axis=-1, keepdims=True)
        e = jnp.exp(z - m)
        return e / jnp.sum(e, axis=-1, keepdims=True)

    preds = jnp.concatenate([softmax2(logits[:, 0:2]),
                             softmax2(logits[:, 2:4]),
                             softmax2(logits[:, 4:6])], axis=-1)
    preds_ref[...] = preds                                  # one store, not three


# ------------------------------ host wrapper --------------------------------

def perceptual_net_forward(image_input, rule_input, p, *, max_block_b=64):
    B, T, Dimg = image_input.shape
    H = p["whh"].shape[0]

    # Batch blocking: whole (8-padded) batch per grid step when small,
    # else max_block_b samples per step. bb is always a multiple of 8.
    bb = min(max_block_b, _round_up(B, 8))
    Bp = _round_up(B, bb)
    nblk = Bp // bb

    def prep(x):                    # (B,T,D) -> (nblk, T*bb, D), time-major rows
        D = x.shape[-1]
        if Bp != B:
            x = jnp.concatenate([x, jnp.zeros((Bp - B, T, D), x.dtype)], axis=0)
        x = x.reshape(nblk, bb, T, D).transpose(0, 2, 1, 3)
        return x.reshape(nblk, T * bb, D)

    img_g = prep(image_input.astype(jnp.float32))
    rule_g = prep(rule_input.astype(jnp.float32))

    # Host-side algebraic fusion (identical math, associativity only):
    #   concat(img, rule@wz + bz) @ [wih_img; wih_zoom] + bih
    # = img@wih_img + rule@(wz@wih_zoom) + (bz@wih_zoom + bih)
    wz_fused = p["wz"] @ p["wih_zoom"]                      # (2, H)
    b_in = p["bz"] @ p["wih_zoom"] + p["bih"]               # (1, H)
    w_heads = jnp.concatenate([p["wr"], p["wa"], p["wg"]], axis=1)   # (H, 6)
    b_heads = jnp.concatenate([p["br"], p["ba"], p["bg"]], axis=1)   # (1, 6)

    def rep(arr):                   # replicated (grid-invariant) 2-D full block
        return pl.BlockSpec(arr.shape, lambda g: (0, 0))

    grid_spec = pltpu.PrefetchScalarGridSpec(
        num_scalar_prefetch=0,
        grid=(nblk,),
        in_specs=[
            pl.BlockSpec((None, T * bb, Dimg), lambda g: (g, 0, 0)),  # image
            pl.BlockSpec((None, T * bb, 2), lambda g: (g, 0, 0)),     # rule
            rep(p["wih_img"]), rep(wz_fused), rep(b_in),
            rep(p["whh"]), rep(p["bhh"]),
            rep(w_heads), rep(b_heads),
        ],
        out_specs=[
            pl.BlockSpec((None, T * bb, H), lambda g: (g, 0, 0)),     # RNN out
            pl.BlockSpec((None, T * bb, 6), lambda g: (g, 0, 0)),     # fused heads
        ],
    )

    out_shape = (
        jax.ShapeDtypeStruct((nblk, T * bb, H), jnp.float32),
        jax.ShapeDtypeStruct((nblk, T * bb, 6), jnp.float32),
    )

    fn = pl.pallas_call(
        functools.partial(perceptual_kernel, T=T, Bb=bb),
        grid_spec=grid_spec,
        out_shape=out_shape,
        compiler_params=pltpu.CompilerParams(
            dimension_semantics=("parallel",)),
    )
    out_tm, preds_tm = fn(img_g, rule_g,
                          p["wih_img"], wz_fused, b_in,
                          p["whh"], p["bhh"], w_heads, b_heads)

    def unprep(y):                  # (nblk, T*bb, C) -> (B, T, C)
        C = y.shape[-1]
        y = y.reshape(nblk, T, bb, C).transpose(0, 2, 1, 3)
        return y.reshape(Bp, T, C)[:B]

    out = unprep(out_tm)
    preds = unprep(preds_tm)
    return preds[..., 0:2], preds[..., 2:4], preds[..., 4:6], out


# ------------------------------ pure-JAX ref ---------------------------------

def reference_forward(image_input, rule_input, p):
    zoom = rule_input @ p["wz"] + p["bz"][0]
    x = jnp.concatenate([image_input, zoom], axis=-1)
    wih = jnp.concatenate([p["wih_img"], p["wih_zoom"]], axis=0)
    B, T, _ = x.shape
    H = p["whh"].shape[0]

    def step(h, xt):
        h_new = jnp.tanh(xt @ wih + p["bih"][0] + h @ p["whh"] + p["bhh"][0])
        return h_new, h_new

    _, outs = jax.lax.scan(step, jnp.zeros((B, H), jnp.float32),
                           jnp.swapaxes(x, 0, 1))
    out = jnp.swapaxes(outs, 0, 1)

    def head(w, b):
        return jax.nn.softmax(out @ w + b[0], axis=-1)

    return (head(p["wr"], p["br"]), head(p["wa"], p["ba"]),
            head(p["wg"], p["bg"]), out)


# --------------------------------- main --------------------------------------

if __name__ == "__main__":
    # Small shapes consistent with the module's forward:
    #   image feature dim Dimg, fc_zoomin_rule output Z=1024 (hard-coded),
    #   RNN input_size = Dimg + Z, hidden_size H.
    B, T, Dimg, Z, H = 2, 8, 128, 1024, 128

    key = jax.random.PRNGKey(0)
    ks = jax.random.split(key, 16)
    s = 0.05  # small deterministic init scale

    params = {
        "wz":       s * jax.random.normal(ks[0], (2, Z), jnp.float32),
        "bz":       s * jax.random.normal(ks[1], (1, Z), jnp.float32),
        "wih_img":  s * jax.random.normal(ks[2], (Dimg, H), jnp.float32),
        "wih_zoom": s * jax.random.normal(ks[3], (Z, H), jnp.float32),
        "bih":      s * jax.random.normal(ks[4], (1, H), jnp.float32),
        "whh":      s * jax.random.normal(ks[5], (H, H), jnp.float32),
        "bhh":      s * jax.random.normal(ks[6], (1, H), jnp.float32),
        "wr":       s * jax.random.normal(ks[7], (H, 2), jnp.float32),
        "br":       s * jax.random.normal(ks[8], (1, 2), jnp.float32),
        "wa":       s * jax.random.normal(ks[9], (H, 2), jnp.float32),
        "ba":       s * jax.random.normal(ks[10], (1, 2), jnp.float32),
        "wg":       s * jax.random.normal(ks[11], (H, 2), jnp.float32),
        "bg":       s * jax.random.normal(ks[12], (1, 2), jnp.float32),
    }

    image_input = jax.random.normal(ks[13], (B, T, Dimg), jnp.float32)
    rule_input = jax.random.normal(ks[14], (B, T, 2), jnp.float32)

    outs = perceptual_net_forward(image_input, rule_input, params)
    outs = jax.block_until_ready(outs)

    refs = reference_forward(image_input, rule_input, params)
    for o, r in zip(outs, refs):
        np.testing.assert_allclose(np.asarray(o), np.asarray(r),
                                   rtol=1e-4, atol=1e-5)

    print("KERNEL_OK")
</pallas_src>

<mosaic_0001>
module attributes {stable_mosaic.version = 11 : i64} {
  func.func @perceptual_kernel(%arg0: i32, %arg1: memref<1x64x128xf32, #tpu.memory_space<vmem>>, %arg2: memref<1x64x2xf32, #tpu.memory_space<vmem>>, %arg3: memref<128x128xf32, #tpu.memory_space<vmem>>, %arg4: memref<2x128xf32, #tpu.memory_space<vmem>>, %arg5: memref<1x128xf32, #tpu.memory_space<vmem>>, %arg6: memref<128x128xf32, #tpu.memory_space<vmem>>, %arg7: memref<1x128xf32, #tpu.memory_space<vmem>>, %arg8: memref<128x6xf32, #tpu.memory_space<vmem>>, %arg9: memref<1x6xf32, #tpu.memory_space<vmem>>, %arg10: memref<1x64x128xf32, #tpu.memory_space<vmem>>, %arg11: memref<1x64x6xf32, #tpu.memory_space<vmem>>) attributes {dimension_semantics = [#tpu.dimension_semantics<parallel>], iteration_bounds = array<i64: 1>, scalar_prefetch = 0 : i64, scratch_operands = 0 : i64, tpu.core_type = #tpu.core_type<tc>, window_params = [{transform_indices = @transform_0, window_bounds = array<i64: 1, 64, 128>}, {transform_indices = @transform_1, window_bounds = array<i64: 1, 64, 2>}, {pipeline_mode = #tpu.pipeline_mode<synchronous>, transform_indices = @transform_2, window_bounds = array<i64: 128, 128>}, {pipeline_mode = #tpu.pipeline_mode<synchronous>, transform_indices = @transform_3, window_bounds = array<i64: 2, 128>}, {pipeline_mode = #tpu.pipeline_mode<synchronous>, transform_indices = @transform_4, window_bounds = array<i64: 1, 128>}, {pipeline_mode = #tpu.pipeline_mode<synchronous>, transform_indices = @transform_5, window_bounds = array<i64: 128, 128>}, {pipeline_mode = #tpu.pipeline_mode<synchronous>, transform_indices = @transform_6, window_bounds = array<i64: 1, 128>}, {pipeline_mode = #tpu.pipeline_mode<synchronous>, transform_indices = @transform_7, window_bounds = array<i64: 128, 6>}, {pipeline_mode = #tpu.pipeline_mode<synchronous>, transform_indices = @transform_8, window_bounds = array<i64: 1, 6>}, {transform_indices = @transform_9, window_bounds = array<i64: 1, 64, 128>}, {transform_indices = @transform_10, window_bounds = array<i64: 1, 64, 6>}]} {
    %c0 = arith.constant 0 : index
    %c0_0 = arith.constant 0 : index
    %c0_1 = arith.constant 0 : index
    %0 = vector.load %arg1[%c0, %c0_0, %c0_1] : memref<1x64x128xf32, #tpu.memory_space<vmem>>, vector<1x64x128xf32>
    %1 = vector.shape_cast %0 : vector<1x64x128xf32> to vector<64x128xf32>
    %c0_2 = arith.constant 0 : index
    %c0_3 = arith.constant 0 : index
    %c0_4 = arith.constant 0 : index
    %2 = vector.load %arg2[%c0_2, %c0_3, %c0_4] : memref<1x64x2xf32, #tpu.memory_space<vmem>>, vector<1x64x2xf32>
    %3 = vector.shape_cast %2 : vector<1x64x2xf32> to vector<64x2xf32>
    %c0_5 = arith.constant 0 : index
    %c0_6 = arith.constant 0 : index
    %4 = vector.load %arg4[%c0_5, %c0_6] : memref<2x128xf32, #tpu.memory_space<vmem>>, vector<2x128xf32>
    %c0_7 = arith.constant 0 : index
    %c0_8 = arith.constant 0 : index
    %5 = vector.load %arg3[%c0_7, %c0_8] : memref<128x128xf32, #tpu.memory_space<vmem>>, vector<128x128xf32>
    %cst = arith.constant dense<0.000000e+00> : vector<64x128xf32>
    %6 = tpu.matmul %1, %5, %cst {dimension_numbers = #tpu.dot_dimension_numbers<[1], [0], [0], [1], [0, 0, 1, 1], [], []>} : vector<64x128xf32>, vector<128x128xf32>, vector<64x128xf32> -> vector<64x128xf32>
    %7 = vector.extract_strided_slice %3 {offsets = [0, 0], sizes = [64, 1], strides = [1, 1]} : vector<64x2xf32> to vector<64x1xf32>
    %8 = vector.extract_strided_slice %4 {offsets = [0, 0], sizes = [1, 128], strides = [1, 1]} : vector<2x128xf32> to vector<1x128xf32>
    %9 = vector.broadcast %7 : vector<64x1xf32> to vector<64x128xf32>
    %10 = vector.broadcast %8 : vector<1x128xf32> to vector<64x128xf32>
    %11 = arith.mulf %9, %10 : vector<64x128xf32>
    %12 = arith.addf %6, %11 : vector<64x128xf32>
    %13 = vector.extract_strided_slice %3 {offsets = [0, 1], sizes = [64, 1], strides = [1, 1]} : vector<64x2xf32> to vector<64x1xf32>
    %14 = vector.extract_strided_slice %4 {offsets = [1, 0], sizes = [1, 128], strides = [1, 1]} : vector<2x128xf32> to vector<1x128xf32>
    %15 = vector.broadcast %13 : vector<64x1xf32> to vector<64x128xf32>
    %16 = vector.broadcast %14 : vector<1x128xf32> to vector<64x128xf32>
    %17 = arith.mulf %15, %16 : vector<64x128xf32>
    %18 = arith.addf %12, %17 : vector<64x128xf32>
    %c0_9 = arith.constant 0 : index
    %c0_10 = arith.constant 0 : index
    %19 = vector.load %arg5[%c0_9, %c0_10] : memref<1x128xf32, #tpu.memory_space<vmem>>, vector<1x128xf32>
    %20 = vector.broadcast %19 : vector<1x128xf32> to vector<64x128xf32>
    %21 = arith.addf %18, %20 : vector<64x128xf32>
    %c0_11 = arith.constant 0 : index
    %c0_12 = arith.constant 0 : index
    %22 = vector.load %arg6[%c0_11, %c0_12] : memref<128x128xf32, #tpu.memory_space<vmem>>, vector<128x128xf32>
    %c0_13 = arith.constant 0 : index
    %c0_14 = arith.constant 0 : index
    %23 = vector.load %arg7[%c0_13, %c0_14] : memref<1x128xf32, #tpu.memory_space<vmem>>, vector<1x128xf32>
    %cst_15 = arith.constant 0.000000e+00 : f32
    %24 = vector.broadcast %cst_15 : f32 to vector<8x128xf32>
    %25 = vector.extract_strided_slice %21 {offsets = [0, 0], sizes = [8, 128], strides = [1, 1]} : vector<64x128xf32> to vector<8x128xf32>
    %cst_16 = arith.constant dense<0.000000e+00> : vector<8x128xf32>
    %26 = tpu.matmul %24, %22, %cst_16 {dimension_numbers = #tpu.dot_dimension_numbers<[1], [0], [0], [1], [0, 0, 1, 1], [], []>} : vector<8x128xf32>, vector<128x128xf32>, vector<8x128xf32> -> vector<8x128xf32>
    %27 = arith.addf %25, %26 : vector<8x128xf32>
    %28 = vector.broadcast %23 : vector<1x128xf32> to vector<8x128xf32>
    %29 = arith.addf %27, %28 : vector<8x128xf32>
    %30 = math.tanh %29 : vector<8x128xf32>
    %c0_17 = arith.constant 0 : index
    %c0_18 = arith.constant 0 : index
    %c0_19 = arith.constant 0 : index
    %31 = vector.load %arg10[%c0_17, %c0_18, %c0_19] : memref<1x64x128xf32, #tpu.memory_space<vmem>>, vector<1x8x128xf32>
    %32 = vector.shape_cast %31 : vector<1x8x128xf32> to vector<8x128xf32>
    %33 = vector.shape_cast %30 : vector<8x128xf32> to vector<1x8x128xf32>
    tpu.vector_store %arg10[%c0_17, %c0_18, %c0_19], %33 {strides = array<i32>} : memref<1x64x128xf32, #tpu.memory_space<vmem>>, vector<1x8x128xf32>,
    %34 = vector.extract_strided_slice %21 {offsets = [8, 0], sizes = [8, 128], strides = [1, 1]} : vector<64x128xf32> to vector<8x128xf32>
    %cst_20 = arith.constant dense<0.000000e+00> : vector<8x128xf32>
    %35 = tpu.matmul %30, %22, %cst_20 {dimension_numbers = #tpu.dot_dimension_numbers<[1], [0], [0], [1], [0, 0, 1, 1], [], []>} : vector<8x128xf32>, vector<128x128xf32>, vector<8x128xf32> -> vector<8x128xf32>
    %36 = arith.addf %34, %35 : vector<8x128xf32>
    %37 = vector.broadcast %23 : vector<1x128xf32> to vector<8x128xf32>
    %38 = arith.addf %36, %37 : vector<8x128xf32>
    %39 = math.tanh %38 : vector<8x128xf32>
    %c0_21 = arith.constant 0 : index
    %c8 = arith.constant 8 : index
    %c0_22 = arith.constant 0 : index
    %40 = vector.load %arg10[%c0_21, %c8, %c0_22] : memref<1x64x128xf32, #tpu.memory_space<vmem>>, vector<1x8x128xf32>
    %41 = vector.shape_cast %40 : vector<1x8x128xf32> to vector<8x128xf32>
    %42 = vector.shape_cast %39 : vector<8x128xf32> to vector<1x8x128xf32>
    tpu.vector_store %arg10[%c0_21, %c8, %c0_22], %42 {strides = array<i32>} : memref<1x64x128xf32, #tpu.memory_space<vmem>>, vector<1x8x128xf32>,
    %43 = vector.extract_strided_slice %21 {offsets = [16, 0], sizes = [8, 128], strides = [1, 1]} : vector<64x128xf32> to vector<8x128xf32>
    %cst_23 = arith.constant dense<0.000000e+00> : vector<8x128xf32>
    %44 = tpu.matmul %39, %22, %cst_23 {dimension_numbers = #tpu.dot_dimension_numbers<[1], [0], [0], [1], [0, 0, 1, 1], [], []>} : vector<8x128xf32>, vector<128x128xf32>, vector<8x128xf32> -> vector<8x128xf32>
    %45 = arith.addf %43, %44 : vector<8x128xf32>
    %46 = vector.broadcast %23 : vector<1x128xf32> to vector<8x128xf32>
    %47 = arith.addf %45, %46 : vector<8x128xf32>
    %48 = math.tanh %47 : vector<8x128xf32>
    %c0_24 = arith.constant 0 : index
    %c16 = arith.constant 16 : index
    %c0_25 = arith.constant 0 : index
    %49 = vector.load %arg10[%c0_24, %c16, %c0_25] : memref<1x64x128xf32, #tpu.memory_space<vmem>>, vector<1x8x128xf32>
    %50 = vector.shape_cast %49 : vector<1x8x128xf32> to vector<8x128xf32>
    %51 = vector.shape_cast %48 : vector<8x128xf32> to vector<1x8x128xf32>
    tpu.vector_store %arg10[%c0_24, %c16, %c0_25], %51 {strides = array<i32>} : memref<1x64x128xf32, #tpu.memory_space<vmem>>, vector<1x8x128xf32>,
    %52 = vector.extract_strided_slice %21 {offsets = [24, 0], sizes = [8, 128], strides = [1, 1]} : vector<64x128xf32> to vector<8x128xf32>
    %cst_26 = arith.constant dense<0.000000e+00> : vector<8x128xf32>
    %53 = tpu.matmul %48, %22, %cst_26 {dimension_numbers = #tpu.dot_dimension_numbers<[1], [0], [0], [1], [0, 0, 1, 1], [], []>} : vector<8x128xf32>, vector<128x128xf32>, vector<8x128xf32> -> vector<8x128xf32>
    %54 = arith.addf %52, %53 : vector<8x128xf32>
    %55 = vector.broadcast %23 : vector<1x128xf32> to vector<8x128xf32>
    %56 = arith.addf %54, %55 : vector<8x128xf32>
    %57 = math.tanh %56 : vector<8x128xf32>
    %c0_27 = arith.constant 0 : index
    %c24 = arith.constant 24 : index
    %c0_28 = arith.constant 0 : index
    %58 = vector.load %arg10[%c0_27, %c24, %c0_28] : memref<1x64x128xf32, #tpu.memory_space<vmem>>, vector<1x8x128xf32>
    %59 = vector.shape_cast %58 : vector<1x8x128xf32> to vector<8x128xf32>
    %60 = vector.shape_cast %57 : vector<8x128xf32> to vector<1x8x128xf32>
    tpu.vector_store %arg10[%c0_27, %c24, %c0_28], %60 {strides = array<i32>} : memref<1x64x128xf32, #tpu.memory_space<vmem>>, vector<1x8x128xf32>,
    %61 = vector.extract_strided_slice %21 {offsets = [32, 0], sizes = [8, 128], strides = [1, 1]} : vector<64x128xf32> to vector<8x128xf32>
    %cst_29 = arith.constant dense<0.000000e+00> : vector<8x128xf32>
    %62 = tpu.matmul %57, %22, %cst_29 {dimension_numbers = #tpu.dot_dimension_numbers<[1], [0], [0], [1], [0, 0, 1, 1], [], []>} : vector<8x128xf32>, vector<128x128xf32>, vector<8x128xf32> -> vector<8x128xf32>
    %63 = arith.addf %61, %62 : vector<8x128xf32>
    %64 = vector.broadcast %23 : vector<1x128xf32> to vector<8x128xf32>
    %65 = arith.addf %63, %64 : vector<8x128xf32>
    %66 = math.tanh %65 : vector<8x128xf32>
    %c0_30 = arith.constant 0 : index
    %c32 = arith.constant 32 : index
    %c0_31 = arith.constant 0 : index
    %67 = vector.load %arg10[%c0_30, %c32, %c0_31] : memref<1x64x128xf32, #tpu.memory_space<vmem>>, vector<1x8x128xf32>
    %68 = vector.shape_cast %67 : vector<1x8x128xf32> to vector<8x128xf32>
    %69 = vector.shape_cast %66 : vector<8x128xf32> to vector<1x8x128xf32>
    tpu.vector_store %arg10[%c0_30, %c32, %c0_31], %69 {strides = array<i32>} : memref<1x64x128xf32, #tpu.memory_space<vmem>>, vector<1x8x128xf32>,
    %70 = vector.extract_strided_slice %21 {offsets = [40, 0], sizes = [8, 128], strides = [1, 1]} : vector<64x128xf32> to vector<8x128xf32>
    %cst_32 = arith.constant dense<0.000000e+00> : vector<8x128xf32>
    %71 = tpu.matmul %66, %22, %cst_32 {dimension_numbers = #tpu.dot_dimension_numbers<[1], [0], [0], [1], [0, 0, 1, 1], [], []>} : vector<8x128xf32>, vector<128x128xf32>, vector<8x128xf32> -> vector<8x128xf32>
    %72 = arith.addf %70, %71 : vector<8x128xf32>
    %73 = vector.broadcast %23 : vector<1x128xf32> to vector<8x128xf32>
    %74 = arith.addf %72, %73 : vector<8x128xf32>
    %75 = math.tanh %74 : vector<8x128xf32>
    %c0_33 = arith.constant 0 : index
    %c40 = arith.constant 40 : index
    %c0_34 = arith.constant 0 : index
    %76 = vector.load %arg10[%c0_33, %c40, %c0_34] : memref<1x64x128xf32, #tpu.memory_space<vmem>>, vector<1x8x128xf32>
    %77 = vector.shape_cast %76 : vector<1x8x128xf32> to vector<8x128xf32>
    %78 = vector.shape_cast %75 : vector<8x128xf32> to vector<1x8x128xf32>
    tpu.vector_store %arg10[%c0_33, %c40, %c0_34], %78 {strides = array<i32>} : memref<1x64x128xf32, #tpu.memory_space<vmem>>, vector<1x8x128xf32>,
    %79 = vector.extract_strided_slice %21 {offsets = [48, 0], sizes = [8, 128], strides = [1, 1]} : vector<64x128xf32> to vector<8x128xf32>
    %cst_35 = arith.constant dense<0.000000e+00> : vector<8x128xf32>
    %80 = tpu.matmul %75, %22, %cst_35 {dimension_numbers = #tpu.dot_dimension_numbers<[1], [0], [0], [1], [0, 0, 1, 1], [], []>} : vector<8x128xf32>, vector<128x128xf32>, vector<8x128xf32> -> vector<8x128xf32>
    %81 = arith.addf %79, %80 : vector<8x128xf32>
    %82 = vector.broadcast %23 : vector<1x128xf32> to vector<8x128xf32>
    %83 = arith.addf %81, %82 : vector<8x128xf32>
    %84 = math.tanh %83 : vector<8x128xf32>
    %c0_36 = arith.constant 0 : index
    %c48 = arith.constant 48 : index
    %c0_37 = arith.constant 0 : index
    %85 = vector.load %arg10[%c0_36, %c48, %c0_37] : memref<1x64x128xf32, #tpu.memory_space<vmem>>, vector<1x8x128xf32>
    %86 = vector.shape_cast %85 : vector<1x8x128xf32> to vector<8x128xf32>
    %87 = vector.shape_cast %84 : vector<8x128xf32> to vector<1x8x128xf32>
    tpu.vector_store %arg10[%c0_36, %c48, %c0_37], %87 {strides = array<i32>} : memref<1x64x128xf32, #tpu.memory_space<vmem>>, vector<1x8x128xf32>,
    %88 = vector.extract_strided_slice %21 {offsets = [56, 0], sizes = [8, 128], strides = [1, 1]} : vector<64x128xf32> to vector<8x128xf32>
    %cst_38 = arith.constant dense<0.000000e+00> : vector<8x128xf32>
    %89 = tpu.matmul %84, %22, %cst_38 {dimension_numbers = #tpu.dot_dimension_numbers<[1], [0], [0], [1], [0, 0, 1, 1], [], []>} : vector<8x128xf32>, vector<128x128xf32>, vector<8x128xf32> -> vector<8x128xf32>
    %90 = arith.addf %88, %89 : vector<8x128xf32>
    %91 = vector.broadcast %23 : vector<1x128xf32> to vector<8x128xf32>
    %92 = arith.addf %90, %91 : vector<8x128xf32>
    %93 = math.tanh %92 : vector<8x128xf32>
    %c0_39 = arith.constant 0 : index
    %c56 = arith.constant 56 : index
    %c0_40 = arith.constant 0 : index
    %94 = vector.load %arg10[%c0_39, %c56, %c0_40] : memref<1x64x128xf32, #tpu.memory_space<vmem>>, vector<1x8x128xf32>
    %95 = vector.shape_cast %94 : vector<1x8x128xf32> to vector<8x128xf32>
    %96 = vector.shape_cast %93 : vector<8x128xf32> to vector<1x8x128xf32>
    tpu.vector_store %arg10[%c0_39, %c56, %c0_40], %96 {strides = array<i32>} : memref<1x64x128xf32, #tpu.memory_space<vmem>>, vector<1x8x128xf32>,
    %c0_41 = arith.constant 0 : index
    %c0_42 = arith.constant 0 : index
    %c0_43 = arith.constant 0 : index
    %97 = vector.load %arg10[%c0_41, %c0_42, %c0_43] : memref<1x64x128xf32, #tpu.memory_space<vmem>>, vector<1x64x128xf32>
    %98 = vector.shape_cast %97 : vector<1x64x128xf32> to vector<64x128xf32>
    %c0_44 = arith.constant 0 : index
    %c0_45 = arith.constant 0 : index
    %99 = vector.load %arg8[%c0_44, %c0_45] : memref<128x6xf32, #tpu.memory_space<vmem>>, vector<128x6xf32>
    %cst_46 = arith.constant dense<0.000000e+00> : vector<64x6xf32>
    %100 = tpu.matmul %98, %99, %cst_46 {dimension_numbers = #tpu.dot_dimension_numbers<[1], [0], [0], [1], [0, 0, 1, 1], [], []>} : vector<64x128xf32>, vector<128x6xf32>, vector<64x6xf32> -> vector<64x6xf32>
    %c0_47 = arith.constant 0 : index
    %c0_48 = arith.constant 0 : index
    %101 = vector.load %arg9[%c0_47, %c0_48] : memref<1x6xf32, #tpu.memory_space<vmem>>, vector<1x6xf32>
    %102 = vector.broadcast %101 : vector<1x6xf32> to vector<64x6xf32>
    %103 = arith.addf %100, %102 : vector<64x6xf32>
    %104 = vector.extract_strided_slice %103 {offsets = [0, 0], sizes = [64, 2], strides = [1, 1]} : vector<64x6xf32> to vector<64x2xf32>
    %cst_49 = arith.constant dense<0xFF800000> : vector<64xf32>
    %105 = vector.multi_reduction <maximumf>, %104, %cst_49 [1] : vector<64x2xf32> to vector<64xf32>
    %106 = vector.shape_cast %105 : vector<64xf32> to vector<64x1xf32>
    %107 = vector.broadcast %106 : vector<64x1xf32> to vector<64x2xf32>
    %108 = arith.subf %104, %107 : vector<64x2xf32>
    %109 = math.exp %108 : vector<64x2xf32>
    %cst_50 = arith.constant dense<0.000000e+00> : vector<64xf32>
    %110 = vector.multi_reduction <add>, %109, %cst_50 [1] : vector<64x2xf32> to vector<64xf32>
    %111 = vector.shape_cast %110 : vector<64xf32> to vector<64x1xf32>
    %112 = vector.broadcast %111 : vector<64x1xf32> to vector<64x2xf32>
    %113 = arith.divf %109, %112 : vector<64x2xf32>
    %114 = vector.extract_strided_slice %103 {offsets = [0, 2], sizes = [64, 2], strides = [1, 1]} : vector<64x6xf32> to vector<64x2xf32>
    %cst_51 = arith.constant dense<0xFF800000> : vector<64xf32>
    %115 = vector.multi_reduction <maximumf>, %114, %cst_51 [1] : vector<64x2xf32> to vector<64xf32>
    %116 = vector.shape_cast %115 : vector<64xf32> to vector<64x1xf32>
    %117 = vector.broadcast %116 : vector<64x1xf32> to vector<64x2xf32>
    %118 = arith.subf %114, %117 : vector<64x2xf32>
    %119 = math.exp %118 : vector<64x2xf32>
    %cst_52 = arith.constant dense<0.000000e+00> : vector<64xf32>
    %120 = vector.multi_reduction <add>, %119, %cst_52 [1] : vector<64x2xf32> to vector<64xf32>
    %121 = vector.shape_cast %120 : vector<64xf32> to vector<64x1xf32>
    %122 = vector.broadcast %121 : vector<64x1xf32> to vector<64x2xf32>
    %123 = arith.divf %119, %122 : vector<64x2xf32>
    %124 = vector.extract_strided_slice %103 {offsets = [0, 4], sizes = [64, 2], strides = [1, 1]} : vector<64x6xf32> to vector<64x2xf32>
    %cst_53 = arith.constant dense<0xFF800000> : vector<64xf32>
    %125 = vector.multi_reduction <maximumf>, %124, %cst_53 [1] : vector<64x2xf32> to vector<64xf32>
    %126 = vector.shape_cast %125 : vector<64xf32> to vector<64x1xf32>
    %127 = vector.broadcast %126 : vector<64x1xf32> to vector<64x2xf32>
    %128 = arith.subf %124, %127 : vector<64x2xf32>
    %129 = math.exp %128 : vector<64x2xf32>
    %cst_54 = arith.constant dense<0.000000e+00> : vector<64xf32>
    %130 = vector.multi_reduction <add>, %129, %cst_54 [1] : vector<64x2xf32> to vector<64xf32>
    %131 = vector.shape_cast %130 : vector<64xf32> to vector<64x1xf32>
    %132 = vector.broadcast %131 : vector<64x1xf32> to vector<64x2xf32>
    %133 = arith.divf %129, %132 : vector<64x2xf32>
    %134 = tpu.concatenate %113, %123, %133 in 1 : vector<64x2xf32>, vector<64x2xf32>, vector<64x2xf32> -> vector<64x6xf32>
    %c0_55 = arith.constant 0 : index
    %c0_56 = arith.constant 0 : index
    %c0_57 = arith.constant 0 : index
    %135 = vector.load %arg11[%c0_55, %c0_56, %c0_57] : memref<1x64x6xf32, #tpu.memory_space<vmem>>, vector<1x64x6xf32>
    %136 = vector.shape_cast %135 : vector<1x64x6xf32> to vector<64x6xf32>
    %137 = vector.shape_cast %134 : vector<64x6xf32> to vector<1x64x6xf32>
    tpu.vector_store %arg11[%c0_55, %c0_56, %c0_57], %137 {strides = array<i32>} : memref<1x64x6xf32, #tpu.memory_space<vmem>>, vector<1x64x6xf32>,
    return
  }
  func.func @transform_0(%arg0: i32) -> (i32, i32, i32) {
    %c0_i32 = arith.constant 0 : i32
    %c0_i32_0 = arith.constant 0 : i32
    %c0_i32_1 = arith.constant 0 : i32
    return %arg0, %c0_i32, %c0_i32_0 : i32, i32, i32
  }
  func.func @transform_1(%arg0: i32) -> (i32, i32, i32) {
    %c0_i32 = arith.constant 0 : i32
    %c0_i32_0 = arith.constant 0 : i32
    %c0_i32_1 = arith.constant 0 : i32
    return %arg0, %c0_i32, %c0_i32_0 : i32, i32, i32
  }
  func.func @transform_2(%arg0: i32) -> (i32, i32) {
    %c0_i32 = arith.constant 0 : i32
    %c0_i32_0 = arith.constant 0 : i32
    %c0_i32_1 = arith.constant 0 : i32
    return %c0_i32, %c0_i32_0 : i32, i32
  }
  func.func @transform_3(%arg0: i32) -> (i32, i32) {
    %c0_i32 = arith.constant 0 : i32
    %c0_i32_0 = arith.constant 0 : i32
    %c0_i32_1 = arith.constant 0 : i32
    return %c0_i32, %c0_i32_0 : i32, i32
  }
  func.func @transform_4(%arg0: i32) -> (i32, i32) {
    %c0_i32 = arith.constant 0 : i32
    %c0_i32_0 = arith.constant 0 : i32
    %c0_i32_1 = arith.constant 0 : i32
    return %c0_i32, %c0_i32_0 : i32, i32
  }
  func.func @transform_5(%arg0: i32) -> (i32, i32) {
    %c0_i32 = arith.constant 0 : i32
    %c0_i32_0 = arith.constant 0 : i32
    %c0_i32_1 = arith.constant 0 : i32
    return %c0_i32, %c0_i32_0 : i32, i32
  }
  func.func @transform_6(%arg0: i32) -> (i32, i32) {
    %c0_i32 = arith.constant 0 : i32
    %c0_i32_0 = arith.constant 0 : i32
    %c0_i32_1 = arith.constant 0 : i32
    return %c0_i32, %c0_i32_0 : i32, i32
  }
  func.func @transform_7(%arg0: i32) -> (i32, i32) {
    %c0_i32 = arith.constant 0 : i32
    %c0_i32_0 = arith.constant 0 : i32
    %c0_i32_1 = arith.constant 0 : i32
    return %c0_i32, %c0_i32_0 : i32, i32
  }
  func.func @transform_8(%arg0: i32) -> (i32, i32) {
    %c0_i32 = arith.constant 0 : i32
    %c0_i32_0 = arith.constant 0 : i32
    %c0_i32_1 = arith.constant 0 : i32
    return %c0_i32, %c0_i32_0 : i32, i32
  }
  func.func @transform_9(%arg0: i32) -> (i32, i32, i32) {
    %c0_i32 = arith.constant 0 : i32
    %c0_i32_0 = arith.constant 0 : i32
    %c0_i32_1 = arith.constant 0 : i32
    return %arg0, %c0_i32, %c0_i32_0 : i32, i32, i32
  }
  func.func @transform_10(%arg0: i32) -> (i32, i32, i32) {
    %c0_i32 = arith.constant 0 : i32
    %c0_i32_0 = arith.constant 0 : i32
    %c0_i32_1 = arith.constant 0 : i32
    return %arg0, %c0_i32, %c0_i32_0 : i32, i32, i32
  }
}

</mosaic_0001>

<llo_original>
// kernel: tpu_custom_call.1
$region0: #{tpu_custom_call.1}
  #allocation0 [shape = 'u32[]', space=smem, size = 0x4, offset = 0x4, fixed_abs, tag = 'smem constant byte address 0x4 - core index']
  #allocation1 [shape = 'u32[144,128]{1,0:T(1,128)}', space=vmem, size = 0x12000, scoped, tag = 'internal scratch']
  %s0 = inlined_call_operand.vmem [shape: f32[1,64,128], index: 0, kind: input, shape index: {}]
  %s1 = inlined_call_operand.vmem [shape: f32[1,64,2], index: 1, kind: input, shape index: {}]
  %s2 = inlined_call_operand.vmem [shape: f32[128,128], index: 2, kind: input, shape index: {}]
  %s3 = inlined_call_operand.vmem [shape: f32[2,128], index: 3, kind: input, shape index: {}]
  %s4 = inlined_call_operand.vmem [shape: f32[1,128], index: 4, kind: input, shape index: {}]
  %s5 = inlined_call_operand.hbm [shape: f32[128,128], index: 5, kind: input, shape index: {}]
  %s6 = inlined_call_operand.vmem [shape: f32[1,128], index: 6, kind: input, shape index: {}]
  %s7 = inlined_call_operand.vmem [shape: f32[128,6], index: 7, kind: input, shape index: {}]
  %s8 = inlined_call_operand.vmem [shape: f32[1,6], index: 8, kind: input, shape index: {}]
  %s9 = inlined_call_operand.hbm [shape: f32[1,64,128], index: 9, kind: output, shape index: {0}]
  %s10 = inlined_call_operand.vmem [shape: f32[1,64,6], index: 10, kind: output, shape index: {1}]
  %11 = xla_tuple %s9, %s10
  %s12 = sld [smem:[#allocation0]]
  $region58: #{tpu_custom_call.1} parent=0
    _
  %s14 = ssub.s32 1, %s12
  %s15 = scalar_select 0, %s14, %s12
  $region1: #{tpu_custom_call.1} parent=0
    #allocation2 [shape = 'u8[65536]{0}', space=vmem, size = 0x10000, scoped, tag = 'input window, operand 5, single buffered']
    #allocation3 [shape = 's32[1]{0}', space=sflag, size = 0x4, scoped, tag = 'scoped memory for tpu_custom_call.1']
    #allocation4 [shape = 's32[1]{0}', space=sflag, size = 0x4, scoped, tag = 'scoped memory for tpu_custom_call.1']
    #allocation5 [shape = 'u8[32768]{0}', space=vmem, size = 0x8000, scoped, tag = 'output window, operand 0, single buffered']
    %16 = vsyncpa [#allocation3], 0
    %17 = vsyncpa [#allocation4], 0
    // Predicated region
    $region2: #{tpu_custom_call.1} parent=1 // pred_check
      _
    $region3: #{tpu_custom_call.1} parent=1 // pred_check_branch
      %19 = sbr.rel (0) target = $region5
    $region4: #{tpu_custom_call.1} parent=1 // pred_region
      _
    $region5: #{tpu_custom_call.1} parent=1 // pred_fallthru
      _
    // Predicated region
    $region6: #{tpu_custom_call.1} parent=1 // pred_check
      _
    $region7: #{tpu_custom_call.1} parent=1 // pred_check_branch
      %21 = sbr.rel (0) target = $region9
    $region8: #{tpu_custom_call.1} parent=1 // pred_region
      _
    $region9: #{tpu_custom_call.1} parent=1 // pred_fallthru
      _
    // Predicated region
    $region10: #{tpu_custom_call.1} parent=1 // pred_check
      _
    $region11: #{tpu_custom_call.1} parent=1 // pred_check_branch
      %23 = sbr.rel (0) target = $region13
    $region12: #{tpu_custom_call.1} parent=1 // pred_region
      _
    $region13: #{tpu_custom_call.1} parent=1 // pred_fallthru
      _
    // Predicated region
    $region14: #{tpu_custom_call.1} parent=1 // pred_check
      _
    $region15: #{tpu_custom_call.1} parent=1 // pred_check_branch
      %25 = sbr.rel (0) target = $region17
    $region16: #{tpu_custom_call.1} parent=1 // pred_region
      _
    $region17: #{tpu_custom_call.1} parent=1 // pred_fallthru
      _
    // Predicated region
    $region18: #{tpu_custom_call.1} parent=1 // pred_check
      _
    $region19: #{tpu_custom_call.1} parent=1 // pred_check_branch
      %27 = sbr.rel (0) target = $region21
    $region20: #{tpu_custom_call.1} parent=1 // pred_region
      _
    $region21: #{tpu_custom_call.1} parent=1 // pred_fallthru
      _
    // Predicated region
    $region22: #{tpu_custom_call.1} parent=1 // pred_check
      _
    $region23: #{tpu_custom_call.1} parent=1 // pred_check_branch
      %29 = sbr.rel (0) target = $region25
    $region24: #{tpu_custom_call.1} parent=1 // pred_region
      %s31 = ssub.s32 2048, 2048
      %32 = vsyncadd [#allocation3], %s31
      %s33 = sshll.u32 [#allocation2], 4
      %s34 = int_to_ptr.vmem [resolvable:$true] %s33
      %39 = dma.hbm_to_vmem [thread:$0]  %s5, 2048, %s34, [#allocation3], 128, 128, 8
    $region25: #{tpu_custom_call.1} parent=1 // pred_fallthru
      _
    // Predicated region
    $region26: #{tpu_custom_call.1} parent=1 // pred_check
      _
    $region27: #{tpu_custom_call.1} parent=1 // pred_check_branch
      %41 = sbr.rel (0) target = $region29
    $region28: #{tpu_custom_call.1} parent=1 // pred_region
      _
    $region29: #{tpu_custom_call.1} parent=1 // pred_fallthru
      _
    // Predicated region
    $region30: #{tpu_custom_call.1} parent=1 // pred_check
      _
    $region31: #{tpu_custom_call.1} parent=1 // pred_check_branch
      %43 = sbr.rel (0) target = $region33
    $region32: #{tpu_custom_call.1} parent=1 // pred_region
      _
    $region33: #{tpu_custom_call.1} parent=1 // pred_fallthru
      _
    // Predicated region
    $region34: #{tpu_custom_call.1} parent=1 // pred_check
      _
    $region35: #{tpu_custom_call.1} parent=1 // pred_check_branch
      %45 = sbr.rel (0) target = $region37
    $region36: #{tpu_custom_call.1} parent=1 // pred_region
      _
    $region37: #{tpu_custom_call.1} parent=1 // pred_fallthru
      _
    // Predicated region
    $region38: #{tpu_custom_call.1} parent=1 // pred_check
      _
    $region39: #{tpu_custom_call.1} parent=1 // pred_check_branch
      %47 = sbr.rel (0) target = $region41
    $region40: #{tpu_custom_call.1} parent=1 // pred_region
      %48 = dma.done [#allocation3], 2048
    $region41: #{tpu_custom_call.1} parent=1 // pred_fallthru
      _
    %v49 = vld [vmem:[%s0] sm:$0xff]
    %v50 = vld [vmem:[%s0 + $0x8] sm:$0xff]
    %v51 = vld [vmem:[%s0 + $0x10] sm:$0xff]
    %v52 = vld [vmem:[%s0 + $0x18] sm:$0xff]
    %v53 = vld [vmem:[%s0 + $0x20] sm:$0xff]
    %v54 = vld [vmem:[%s0 + $0x28] sm:$0xff]
    %v55 = vld [vmem:[%s0 + $0x30] sm:$0xff]
    %v56 = vld [vmem:[%s0 + $0x38] sm:$0xff]
    %v57 = vld [vmem:[%s1] sm:$0xff]
    %v58 = vld [vmem:[%s1 + $0x8] sm:$0xff]
    %v59 = vld [vmem:[%s1 + $0x10] sm:$0xff]
    %v60 = vld [vmem:[%s1 + $0x18] sm:$0xff]
    %v61 = vld [vmem:[%s1 + $0x20] sm:$0xff]
    %v62 = vld [vmem:[%s1 + $0x28] sm:$0xff]
    %v63 = vld [vmem:[%s1 + $0x30] sm:$0xff]
    %v64 = vld [vmem:[%s1 + $0x38] sm:$0xff]
    %v65 = vld [vmem:[%s3] sm:$0x3]
    %v66 = vld [vmem:[%s2] sm:$0xff]
    %v67 = vld [vmem:[%s2 + $0x8] sm:$0xff]
    %v68 = vld [vmem:[%s2 + $0x10] sm:$0xff]
    %v69 = vld [vmem:[%s2 + $0x18] sm:$0xff]
    %v70 = vld [vmem:[%s2 + $0x20] sm:$0xff]
    %v71 = vld [vmem:[%s2 + $0x28] sm:$0xff]
    %v72 = vld [vmem:[%s2 + $0x30] sm:$0xff]
    %v73 = vld [vmem:[%s2 + $0x38] sm:$0xff]
    %v74 = vld [vmem:[%s2 + $0x40] sm:$0xff]
    %v75 = vld [vmem:[%s2 + $0x48] sm:$0xff]
    %v76 = vld [vmem:[%s2 + $0x50] sm:$0xff]
    %v77 = vld [vmem:[%s2 + $0x58] sm:$0xff]
    %v78 = vld [vmem:[%s2 + $0x60] sm:$0xff]
    %v79 = vld [vmem:[%s2 + $0x68] sm:$0xff]
    %v80 = vld [vmem:[%s2 + $0x70] sm:$0xff]
    %v81 = vld [vmem:[%s2 + $0x78] sm:$0xff]
    %83 = vset.pattern.permute.xlu0 0
    %84 = vperm.xlu0 %83, %v57
    %v85 = vpop.permute.xlu0 %84
    %88 = vset.pattern.permute.xlu0 0
    %89 = vperm.xlu0 %88, %v58
    %v90 = vpop.permute.xlu0 %89
    %93 = vset.pattern.permute.xlu0 0
    %94 = vperm.xlu0 %93, %v59
    %v95 = vpop.permute.xlu0 %94
    %98 = vset.pattern.permute.xlu0 0
    %99 = vperm.xlu0 %98, %v60
    %v100 = vpop.permute.xlu0 %99
    %103 = vset.pattern.permute.xlu0 0
    %104 = vperm.xlu0 %103, %v61
    %v105 = vpop.permute.xlu0 %104
    %108 = vset.pattern.permute.xlu0 0
    %109 = vperm.xlu0 %108, %v62
    %v110 = vpop.permute.xlu0 %109
    %113 = vset.pattern.permute.xlu0 0
    %114 = vperm.xlu0 %113, %v63
    %v115 = vpop.permute.xlu0 %114
    %118 = vset.pattern.permute.xlu0 0
    %119 = vperm.xlu0 %118, %v64
    %v120 = vpop.permute.xlu0 %119
    %v122 = vlaneseq
    %v123 = vshrl.u32 %v122, 7
    %v124 = vsub.s32 0, %v123
    %v125 = vrot.slane %v65, %v124
    %v126 = vmul.f32 %v85, %v125
    %v127 = vmul.f32 %v90, %v125
    %v128 = vmul.f32 %v95, %v125
    %v129 = vmul.f32 %v100, %v125
    %v130 = vmul.f32 %v105, %v125
    %v131 = vmul.f32 %v110, %v125
    %v132 = vmul.f32 %v115, %v125
    %v133 = vmul.f32 %v120, %v125
    %134 = vmatprep.subr.mxu0 0.0
    %135 = vmatpush1.msra.mxu0 %v66
    %136 = vmatprep.subr.mxu0 0.0
    %137 = vmatpush1.msra.mxu0 %v67
    %138 = vmatprep.subr.mxu0 0.0
    %139 = vmatpush1.msra.mxu0 %v68
    %140 = vmatprep.subr.mxu0 0.0
    %141 = vmatpush1.msra.mxu0 %v69
    %142 = vmatprep.subr.mxu0 0.0
    %143 = vmatpush1.msra.mxu0 %v70
    %144 = vmatprep.subr.mxu0 0.0
    %145 = vmatpush1.msra.mxu0 %v71
    %146 = vmatprep.subr.mxu0 0.0
    %147 = vmatpush1.msra.mxu0 %v72
    %148 = vmatprep.subr.mxu0 0.0
    %149 = vmatpush1.msra.mxu0 %v73
    %150 = vmatprep.subr.mxu0 0.0
    %151 = vmatpush1.msra.mxu0 %v74
    %152 = vmatprep.subr.mxu0 0.0
    %153 = vmatpush1.msra.mxu0 %v75
    %154 = vmatprep.subr.mxu0 0.0
    %155 = vmatpush1.msra.mxu0 %v76
    %156 = vmatprep.subr.mxu0 0.0
    %157 = vmatpush1.msra.mxu0 %v77
    %158 = vmatprep.subr.mxu0 0.0
    %159 = vmatpush1.msra.mxu0 %v78
    %160 = vmatprep.subr.mxu0 0.0
    %161 = vmatpush1.msra.mxu0 %v79
    %162 = vmatprep.subr.mxu0 0.0
    %163 = vmatpush1.msra.mxu0 %v80
    %164 = vmatprep.subr.mxu0 0.0
    %165 = vmatpush1.msra.mxu0 %v81
    %166 = vmatprep.subr.mxu0 0.0
    %167 = vmatpush1.msra.mxu0 0.0
    %168 = vmatprep.subr.mxu0 0.0
    %169 = vmatpush1.msra.mxu0 0.0
    %170 = vmatprep.subr.mxu0 0.0
    %171 = vmatpush1.msra.mxu0 0.0
    %172 = vmatprep.subr.mxu0 0.0
    %173 = vmatpush1.msra.mxu0 0.0
    %174 = vmatprep.subr.mxu0 0.0
    %175 = vmatpush1.msra.mxu0 0.0
    %176 = vmatprep.subr.mxu0 0.0
    %177 = vmatpush1.msra.mxu0 0.0
    %178 = vmatprep.subr.mxu0 0.0
    %179 = vmatpush1.msra.mxu0 0.0
    %180 = vmatprep.subr.mxu0 0.0
    %181 = vmatpush1.msra.mxu0 0.0
    %182 = vmatprep.subr.mxu0 0.0
    %183 = vmatpush1.msra.mxu0 0.0
    %184 = vmatprep.subr.mxu0 0.0
    %185 = vmatpush1.msra.mxu0 0.0
    %186 = vmatprep.subr.mxu0 0.0
    %187 = vmatpush1.msra.mxu0 0.0
    %188 = vmatprep.subr.mxu0 0.0
    %189 = vmatpush1.msra.mxu0 0.0
    %190 = vmatprep.subr.mxu0 0.0
    %191 = vmatpush1.msra.mxu0 0.0
    %192 = vmatprep.subr.mxu0 0.0
    %193 = vmatpush1.msra.mxu0 0.0
    %194 = vmatprep.subr.mxu0 0.0
    %195 = vmatpush1.msra.mxu0 0.0
    %196 = vmatprep.subr.mxu0 0.0
    %197 = vmatpush1.msra.mxu0 0.0
    %198 = vmatprep.mubr.f32.mxu0 0.0
    %199 = vmatmul.mubr.f32.gmra.mrb[0].mxu0 %v49
    %v200 = vpop.f32.mrb[0].mxu0
    %v201 = vadd.f32 %v126, %v200
    %v202 = vpop.f32.mrb[0].mxu0
    %203 = vmatprep.mubr.f32.mxu0 0.0
    %204 = vmatmul.mubr.f32.gmra.mrb[0].mxu0 %v50
    %v205 = vpop.f32.mrb[0].mxu0
    %v206 = vadd.f32 %v127, %v205
    %v207 = vpop.f32.mrb[0].mxu0
    %208 = vmatprep.mubr.f32.mxu0 0.0
    %209 = vmatmul.mubr.f32.gmra.mrb[0].mxu0 %v51
    %v210 = vpop.f32.mrb[0].mxu0
    %v211 = vadd.f32 %v128, %v210
    %v212 = vpop.f32.mrb[0].mxu0
    %213 = vmatprep.mubr.f32.mxu0 0.0
    %214 = vmatmul.mubr.f32.gmra.mrb[0].mxu0 %v52
    %v215 = vpop.f32.mrb[0].mxu0
    %v216 = vadd.f32 %v129, %v215
    %v217 = vpop.f32.mrb[0].mxu0
    %218 = vmatprep.mubr.f32.mxu0 0.0
    %219 = vmatmul.mubr.f32.gmra.mrb[0].mxu0 %v53
    %v220 = vpop.f32.mrb[0].mxu0
    %v221 = vadd.f32 %v130, %v220
    %v222 = vpop.f32.mrb[0].mxu0
    %223 = vmatprep.mubr.f32.mxu0 0.0
    %224 = vmatmul.mubr.f32.gmra.mrb[0].mxu0 %v54
    %v225 = vpop.f32.mrb[0].mxu0
    %v226 = vadd.f32 %v131, %v225
    %v227 = vpop.f32.mrb[0].mxu0
    %228 = vmatprep.mubr.f32.mxu0 0.0
    %229 = vmatmul.mubr.f32.gmra.mrb[0].mxu0 %v55
    %v230 = vpop.f32.mrb[0].mxu0
    %v231 = vadd.f32 %v132, %v230
    %v232 = vpop.f32.mrb[0].mxu0
    %233 = vmatprep.mubr.f32.mxu0 0.0
    %234 = vmatmul.mubr.f32.gmra.mrb[0].mxu0 %v56
    %v235 = vpop.f32.mrb[0].mxu0
    %v236 = vadd.f32 %v133, %v235
    %v237 = vpop.f32.mrb[0].mxu0
    %238 = vdwg.mxu0
    %239 = vset.pattern.permute.xlu0 1
    %240 = vperm.xlu0 %239, %v57
    %v241 = vpop.permute.xlu0 %240
    %243 = vset.pattern.permute.xlu0 1
    %244 = vperm.xlu0 %243, %v58
    %v245 = vpop.permute.xlu0 %244
    %247 = vset.pattern.permute.xlu0 1
    %248 = vperm.xlu0 %247, %v59
    %v249 = vpop.permute.xlu0 %248
    %251 = vset.pattern.permute.xlu0 1
    %252 = vperm.xlu0 %251, %v60
    %v253 = vpop.permute.xlu0 %252
    %255 = vset.pattern.permute.xlu0 1
    %256 = vperm.xlu0 %255, %v61
    %v257 = vpop.permute.xlu0 %256
    %259 = vset.pattern.permute.xlu0 1
    %260 = vperm.xlu0 %259, %v62
    %v261 = vpop.permute.xlu0 %260
    %263 = vset.pattern.permute.xlu0 1
    %264 = vperm.xlu0 %263, %v63
    %v265 = vpop.permute.xlu0 %264
    %267 = vset.pattern.permute.xlu0 1
    %268 = vperm.xlu0 %267, %v64
    %v269 = vpop.permute.xlu0 %268
    %v271 = vlaneseq
    %v272 = vshrl.u32 %v271, 7
    %v273 = vsub.s32 1, %v272
    %v274 = vrot.slane %v65, %v273
    %v275 = vmul.f32 %v241, %v274
    %v276 = vmul.f32 %v245, %v274
    %v277 = vmul.f32 %v249, %v274
    %v278 = vmul.f32 %v253, %v274
    %v279 = vmul.f32 %v257, %v274
    %v280 = vmul.f32 %v261, %v274
    %v281 = vmul.f32 %v265, %v274
    %v282 = vmul.f32 %v269, %v274
    %v283 = vadd.f32 %v201, %v275
    %v284 = vadd.f32 %v206, %v276
    %v285 = vadd.f32 %v211, %v277
    %v286 = vadd.f32 %v216, %v278
    %v287 = vadd.f32 %v221, %v279
    %v288 = vadd.f32 %v226, %v280
    %v289 = vadd.f32 %v231, %v281
    %v290 = vadd.f32 %v236, %v282
    %v291 = vld [vmem:[%s4] sm:$0x1]
    %v293 = vlaneseq
    %v294 = vshrl.u32 %v293, 7
    %v295 = vsub.s32 0, %v294
    %v296 = vrot.slane %v291, %v295
    %v298 = vadd.f32 %v283, %v296
    %v299 = vadd.f32 %v284, %v296
    %v300 = vadd.f32 %v285, %v296
    %v301 = vadd.f32 %v286, %v296
    %v302 = vadd.f32 %v287, %v296
    %v303 = vadd.f32 %v288, %v296
    %v304 = vadd.f32 %v289, %v296
    %v305 = vadd.f32 %v290, %v296
    %v306 = vld [vmem:[#allocation2] sm:$0xff]
    %v307 = vld [vmem:[#allocation2 + $0x8] sm:$0xff]
    %v308 = vld [vmem:[#allocation2 + $0x10] sm:$0xff]
    %v309 = vld [vmem:[#allocation2 + $0x18] sm:$0xff]
    %v310 = vld [vmem:[#allocation2 + $0x20] sm:$0xff]
    %v311 = vld [vmem:[#allocation2 + $0x28] sm:$0xff]
    %v312 = vld [vmem:[#allocation2 + $0x30] sm:$0xff]
    %v313 = vld [vmem:[#allocation2 + $0x38] sm:$0xff]
    %v314 = vld [vmem:[#allocation2 + $0x40] sm:$0xff]
    %v315 = vld [vmem:[#allocation2 + $0x48] sm:$0xff]
    %v316 = vld [vmem:[#allocation2 + $0x50] sm:$0xff]
    %v317 = vld [vmem:[#allocation2 + $0x58] sm:$0xff]
    %v318 = vld [vmem:[#allocation2 + $0x60] sm:$0xff]
    %v319 = vld [vmem:[#allocation2 + $0x68] sm:$0xff]
    %v320 = vld [vmem:[#allocation2 + $0x70] sm:$0xff]
    %v321 = vld [vmem:[#allocation2 + $0x78] sm:$0xff]
    %v322 = vld [vmem:[%s6] sm:$0x1]
    %323 = vmatprep.subr.mxu0 0.0
    %324 = vmatpush1.msra.mxu0 %v306
    %325 = vmatprep.subr.mxu0 0.0
    %326 = vmatpush1.msra.mxu0 %v307
    %327 = vmatprep.subr.mxu0 0.0
    %328 = vmatpush1.msra.mxu0 %v308
    %329 = vmatprep.subr.mxu0 0.0
    %330 = vmatpush1.msra.mxu0 %v309
    %331 = vmatprep.subr.mxu0 0.0
    %332 = vmatpush1.msra.mxu0 %v310
    %333 = vmatprep.subr.mxu0 0.0
    %334 = vmatpush1.msra.mxu0 %v311
    %335 = vmatprep.subr.mxu0 0.0
    %336 = vmatpush1.msra.mxu0 %v312
    %337 = vmatprep.subr.mxu0 0.0
    %338 = vmatpush1.msra.mxu0 %v313
    %339 = vmatprep.subr.mxu0 0.0
    %340 = vmatpush1.msra.mxu0 %v314
    %341 = vmatprep.subr.mxu0 0.0
    %342 = vmatpush1.msra.mxu0 %v315
    %343 = vmatprep.subr.mxu0 0.0
    %344 = vmatpush1.msra.mxu0 %v316
    %345 = vmatprep.subr.mxu0 0.0
    %346 = vmatpush1.msra.mxu0 %v317
    %347 = vmatprep.subr.mxu0 0.0
    %348 = vmatpush1.msra.mxu0 %v318
    %349 = vmatprep.subr.mxu0 0.0
    %350 = vmatpush1.msra.mxu0 %v319
    %351 = vmatprep.subr.mxu0 0.0
    %352 = vmatpush1.msra.mxu0 %v320
    %353 = vmatprep.subr.mxu0 0.0
    %354 = vmatpush1.msra.mxu0 %v321
    %355 = vmatprep.subr.mxu0 0.0
    %356 = vmatpush1.msra.mxu0 0.0
    %357 = vmatprep.subr.mxu0 0.0
    %358 = vmatpush1.msra.mxu0 0.0
    %359 = vmatprep.subr.mxu0 0.0
    %360 = vmatpush1.msra.mxu0 0.0
    %361 = vmatprep.subr.mxu0 0.0
    %362 = vmatpush1.msra.mxu0 0.0
    %363 = vmatprep.subr.mxu0 0.0
    %364 = vmatpush1.msra.mxu0 0.0
    %365 = vmatprep.subr.mxu0 0.0
    %366 = vmatpush1.msra.mxu0 0.0
    %367 = vmatprep.subr.mxu0 0.0
    %368 = vmatpush1.msra.mxu0 0.0
    %369 = vmatprep.subr.mxu0 0.0
    %370 = vmatpush1.msra.mxu0 0.0
    %371 = vmatprep.subr.mxu0 0.0
    %372 = vmatpush1.msra.mxu0 0.0
    %373 = vmatprep.subr.mxu0 0.0
    %374 = vmatpush1.msra.mxu0 0.0
    %375 = vmatprep.subr.mxu0 0.0
    %376 = vmatpush1.msra.mxu0 0.0
    %377 = vmatprep.subr.mxu0 0.0
    %378 = vmatpush1.msra.mxu0 0.0
    %379 = vmatprep.subr.mxu0 0.0
    %380 = vmatpush1.msra.mxu0 0.0
    %381 = vmatprep.subr.mxu0 0.0
    %382 = vmatpush1.msra.mxu0 0.0
    %383 = vmatprep.subr.mxu0 0.0
    %384 = vmatpush1.msra.mxu0 0.0
    %385 = vmatprep.subr.mxu0 0.0
    %386 = vmatpush1.msra.mxu0 0.0
    %387 = vmatprep.mubr.f32.mxu0 0.0
    %388 = vmatmul.mubr.f32.gmra.mrb[0].mxu0 0.0
    %v389 = vpop.f32.mrb[0].mxu0
    %v390 = vadd.f32 0.0, %v389
    %v391 = vpop.f32.mrb[0].mxu0
    %392 = vdwg.mxu0
    %v393 = vadd.f32 %v298, %v390
    %v395 = vlaneseq
    %v396 = vshrl.u32 %v395, 7
    %v397 = vsub.s32 0, %v396
    %v398 = vrot.slane %v322, %v397
    %v400 = vadd.f32 %v393, %v398
    %v401 = vtanh.pop %v400
    %402 = vst [vmem:[#allocation5] sm:$0xff] %v401
    %403 = vmatprep.subr.mxu0 0.0
    %404 = vmatpush1.msra.mxu0 %v306
    %405 = vmatprep.subr.mxu0 0.0
    %406 = vmatpush1.msra.mxu0 %v307
    %407 = vmatprep.subr.mxu0 0.0
    %408 = vmatpush1.msra.mxu0 %v308
    %409 = vmatprep.subr.mxu0 0.0
    %410 = vmatpush1.msra.mxu0 %v309
    %411 = vmatprep.subr.mxu0 0.0
    %412 = vmatpush1.msra.mxu0 %v310
    %413 = vmatprep.subr.mxu0 0.0
    %414 = vmatpush1.msra.mxu0 %v311
    %415 = vmatprep.subr.mxu0 0.0
    %416 = vmatpush1.msra.mxu0 %v312
    %417 = vmatprep.subr.mxu0 0.0
    %418 = vmatpush1.msra.mxu0 %v313
    %419 = vmatprep.subr.mxu0 0.0
    %420 = vmatpush1.msra.mxu0 %v314
    %421 = vmatprep.subr.mxu0 0.0
    %422 = vmatpush1.msra.mxu0 %v315
    %423 = vmatprep.subr.mxu0 0.0
    %424 = vmatpush1.msra.mxu0 %v316
    %425 = vmatprep.subr.mxu0 0.0
    %426 = vmatpush1.msra.mxu0 %v317
    %427 = vmatprep.subr.mxu0 0.0
    %428 = vmatpush1.msra.mxu0 %v318
    %429 = vmatprep.subr.mxu0 0.0
    %430 = vmatpush1.msra.mxu0 %v319
    %431 = vmatprep.subr.mxu0 0.0
    %432 = vmatpush1.msra.mxu0 %v320
    %433 = vmatprep.subr.mxu0 0.0
    %434 = vmatpush1.msra.mxu0 %v321
    %435 = vmatprep.subr.mxu0 0.0
    %436 = vmatpush1.msra.mxu0 0.0
    %437 = vmatprep.subr.mxu0 0.0
    %438 = vmatpush1.msra.mxu0 0.0
    %439 = vmatprep.subr.mxu0 0.0
    %440 = vmatpush1.msra.mxu0 0.0
    %441 = vmatprep.subr.mxu0 0.0
    %442 = vmatpush1.msra.mxu0 0.0
    %443 = vmatprep.subr.mxu0 0.0
    %444 = vmatpush1.msra.mxu0 0.0
    %445 = vmatprep.subr.mxu0 0.0
    %446 = vmatpush1.msra.mxu0 0.0
    %447 = vmatprep.subr.mxu0 0.0
    %448 = vmatpush1.msra.mxu0 0.0
    %449 = vmatprep.subr.mxu0 0.0
    %450 = vmatpush1.msra.mxu0 0.0
    %451 = vmatprep.subr.mxu0 0.0
    %452 = vmatpush1.msra.mxu0 0.0
    %453 = vmatprep.subr.mxu0 0.0
    %454 = vmatpush1.msra.mxu0 0.0
    %455 = vmatprep.subr.mxu0 0.0
    %456 = vmatpush1.msra.mxu0 0.0
    %457 = vmatprep.subr.mxu0 0.0
    %458 = vmatpush1.msra.mxu0 0.0
    %459 = vmatprep.subr.mxu0 0.0
    %460 = vmatpush1.msra.mxu0 0.0
    %461 = vmatprep.subr.mxu0 0.0
    %462 = vmatpush1.msra.mxu0 0.0
    %463 = vmatprep.subr.mxu0 0.0
    %464 = vmatpush1.msra.mxu0 0.0
    %465 = vmatprep.subr.mxu0 0.0
    %466 = vmatpush1.msra.mxu0 0.0
    %467 = vmatprep.mubr.f32.mxu0 0.0
    %468 = vmatmul.mubr.f32.gmra.mrb[0].mxu0 %v401
    %v469 = vpop.f32.mrb[0].mxu0
    %v470 = vadd.f32 0.0, %v469
    %v471 = vpop.f32.mrb[0].mxu0
    %472 = vdwg.mxu0
    %v473 = vadd.f32 %v299, %v470
    %v474 = vadd.f32 %v473, %v398
    %v475 = vtanh.pop %v474
    %476 = vst [vmem:[#allocation5 + $0x8] sm:$0xff] %v475
    %477 = vmatprep.subr.mxu0 0.0
    %478 = vmatpush1.msra.mxu0 %v306
    %479 = vmatprep.subr.mxu0 0.0
    %480 = vmatpush1.msra.mxu0 %v307
    %481 = vmatprep.subr.mxu0 0.0
    %482 = vmatpush1.msra.mxu0 %v308
    %483 = vmatprep.subr.mxu0 0.0
    %484 = vmatpush1.msra.mxu0 %v309
    %485 = vmatprep.subr.mxu0 0.0
    %486 = vmatpush1.msra.mxu0 %v310
    %487 = vmatprep.subr.mxu0 0.0
    %488 = vmatpush1.msra.mxu0 %v311
    %489 = vmatprep.subr.mxu0 0.0
    %490 = vmatpush1.msra.mxu0 %v312
    %491 = vmatprep.subr.mxu0 0.0
    %492 = vmatpush1.msra.mxu0 %v313
    %493 = vmatprep.subr.mxu0 0.0
    %494 = vmatpush1.msra.mxu0 %v314
    %495 = vmatprep.subr.mxu0 0.0
    %496 = vmatpush1.msra.mxu0 %v315
    %497 = vmatprep.subr.mxu0 0.0
    %498 = vmatpush1.msra.mxu0 %v316
    %499 = vmatprep.subr.mxu0 0.0
    %500 = vmatpush1.msra.mxu0 %v317
    %501 = vmatprep.subr.mxu0 0.0
    %502 = vmatpush1.msra.mxu0 %v318
    %503 = vmatprep.subr.mxu0 0.0
    %504 = vmatpush1.msra.mxu0 %v319
    %505 = vmatprep.subr.mxu0 0.0
    %506 = vmatpush1.msra.mxu0 %v320
    %507 = vmatprep.subr.mxu0 0.0
    %508 = vmatpush1.msra.mxu0 %v321
    %509 = vmatprep.subr.mxu0 0.0
    %510 = vmatpush1.msra.mxu0 0.0
    %511 = vmatprep.subr.mxu0 0.0
    %512 = vmatpush1.msra.mxu0 0.0
    %513 = vmatprep.subr.mxu0 0.0
    %514 = vmatpush1.msra.mxu0 0.0
    %515 = vmatprep.subr.mxu0 0.0
    %516 = vmatpush1.msra.mxu0 0.0
    %517 = vmatprep.subr.mxu0 0.0
    %518 = vmatpush1.msra.mxu0 0.0
    %519 = vmatprep.subr.mxu0 0.0
    %520 = vmatpush1.msra.mxu0 0.0
    %521 = vmatprep.subr.mxu0 0.0
    %522 = vmatpush1.msra.mxu0 0.0
    %523 = vmatprep.subr.mxu0 0.0
    %524 = vmatpush1.msra.mxu0 0.0
    %525 = vmatprep.subr.mxu0 0.0
    %526 = vmatpush1.msra.mxu0 0.0
    %527 = vmatprep.subr.mxu0 0.0
    %528 = vmatpush1.msra.mxu0 0.0
    %529 = vmatprep.subr.mxu0 0.0
    %530 = vmatpush1.msra.mxu0 0.0
    %531 = vmatprep.subr.mxu0 0.0
    %532 = vmatpush1.msra.mxu0 0.0
    %533 = vmatprep.subr.mxu0 0.0
    %534 = vmatpush1.msra.mxu0 0.0
    %535 = vmatprep.subr.mxu0 0.0
    %536 = vmatpush1.msra.mxu0 0.0
    %537 = vmatprep.subr.mxu0 0.0
    %538 = vmatpush1.msra.mxu0 0.0
    %539 = vmatprep.subr.mxu0 0.0
    %540 = vmatpush1.msra.mxu0 0.0
    %541 = vmatprep.mubr.f32.mxu0 0.0
    %542 = vmatmul.mubr.f32.gmra.mrb[0].mxu0 %v475
    %v543 = vpop.f32.mrb[0].mxu0
    %v544 = vadd.f32 0.0, %v543
    %v545 = vpop.f32.mrb[0].mxu0
    %546 = vdwg.mxu0
    %v547 = vadd.f32 %v300, %v544
    %v548 = vadd.f32 %v547, %v398
    %v549 = vtanh.pop %v548
    %550 = vst [vmem:[#allocation5 + $0x10] sm:$0xff] %v549
    %551 = vmatprep.subr.mxu0 0.0
    %552 = vmatpush1.msra.mxu0 %v306
    %553 = vmatprep.subr.mxu0 0.0
    %554 = vmatpush1.msra.mxu0 %v307
    %555 = vmatprep.subr.mxu0 0.0
    %556 = vmatpush1.msra.mxu0 %v308
    %557 = vmatprep.subr.mxu0 0.0
    %558 = vmatpush1.msra.mxu0 %v309
    %559 = vmatprep.subr.mxu0 0.0
    %560 = vmatpush1.msra.mxu0 %v310
    %561 = vmatprep.subr.mxu0 0.0
    %562 = vmatpush1.msra.mxu0 %v311
    %563 = vmatprep.subr.mxu0 0.0
    %564 = vmatpush1.msra.mxu0 %v312
    %565 = vmatprep.subr.mxu0 0.0
    %566 = vmatpush1.msra.mxu0 %v313
    %567 = vmatprep.subr.mxu0 0.0
    %568 = vmatpush1.msra.mxu0 %v314
    %569 = vmatprep.subr.mxu0 0.0
    %570 = vmatpush1.msra.mxu0 %v315
    %571 = vmatprep.subr.mxu0 0.0
    %572 = vmatpush1.msra.mxu0 %v316
    %573 = vmatprep.subr.mxu0 0.0
    %574 = vmatpush1.msra.mxu0 %v317
    %575 = vmatprep.subr.mxu0 0.0
    %576 = vmatpush1.msra.mxu0 %v318
    %577 = vmatprep.subr.mxu0 0.0
    %578 = vmatpush1.msra.mxu0 %v319
    %579 = vmatprep.subr.mxu0 0.0
    %580 = vmatpush1.msra.mxu0 %v320
    %581 = vmatprep.subr.mxu0 0.0
    %582 = vmatpush1.msra.mxu0 %v321
    %583 = vmatprep.subr.mxu0 0.0
    %584 = vmatpush1.msra.mxu0 0.0
    %585 = vmatprep.subr.mxu0 0.0
    %586 = vmatpush1.msra.mxu0 0.0
    %587 = vmatprep.subr.mxu0 0.0
    %588 = vmatpush1.msra.mxu0 0.0
    %589 = vmatprep.subr.mxu0 0.0
    %590 = vmatpush1.msra.mxu0 0.0
    %591 = vmatprep.subr.mxu0 0.0
    %592 = vmatpush1.msra.mxu0 0.0
    %593 = vmatprep.subr.mxu0 0.0
    %594 = vmatpush1.msra.mxu0 0.0
    %595 = vmatprep.subr.mxu0 0.0
    %596 = vmatpush1.msra.mxu0 0.0
    %597 = vmatprep.subr.mxu0 0.0
    %598 = vmatpush1.msra.mxu0 0.0
    %599 = vmatprep.subr.mxu0 0.0
    %600 = vmatpush1.msra.mxu0 0.0
    %601 = vmatprep.subr.mxu0 0.0
    %602 = vmatpush1.msra.mxu0 0.0
    %603 = vmatprep.subr.mxu0 0.0
    %604 = vmatpush1.msra.mxu0 0.0
    %605 = vmatprep.subr.mxu0 0.0
    %606 = vmatpush1.msra.mxu0 0.0
    %607 = vmatprep.subr.mxu0 0.0
    %608 = vmatpush1.msra.mxu0 0.0
    %609 = vmatprep.subr.mxu0 0.0
    %610 = vmatpush1.msra.mxu0 0.0
    %611 = vmatprep.subr.mxu0 0.0
    %612 = vmatpush1.msra.mxu0 0.0
    %613 = vmatprep.subr.mxu0 0.0
    %614 = vmatpush1.msra.mxu0 0.0
    %615 = vmatprep.mubr.f32.mxu0 0.0
    %616 = vmatmul.mubr.f32.gmra.mrb[0].mxu0 %v549
    %v617 = vpop.f32.mrb[0].mxu0
    %v618 = vadd.f32 0.0, %v617
    %v619 = vpop.f32.mrb[0].mxu0
    %620 = vdwg.mxu0
    %v621 = vadd.f32 %v301, %v618
    %v622 = vadd.f32 %v621, %v398
    %v623 = vtanh.pop %v622
    %624 = vst [vmem:[#allocation5 + $0x18] sm:$0xff] %v623
    %625 = vmatprep.subr.mxu0 0.0
    %626 = vmatpush1.msra.mxu0 %v306
    %627 = vmatprep.subr.mxu0 0.0
    %628 = vmatpush1.msra.mxu0 %v307
    %629 = vmatprep.subr.mxu0 0.0
    %630 = vmatpush1.msra.mxu0 %v308
    %631 = vmatprep.subr.mxu0 0.0
    %632 = vmatpush1.msra.mxu0 %v309
    %633 = vmatprep.subr.mxu0 0.0
    %634 = vmatpush1.msra.mxu0 %v310
    %635 = vmatprep.subr.mxu0 0.0
    %636 = vmatpush1.msra.mxu0 %v311
    %637 = vmatprep.subr.mxu0 0.0
    %638 = vmatpush1.msra.mxu0 %v312
    %639 = vmatprep.subr.mxu0 0.0
    %640 = vmatpush1.msra.mxu0 %v313
    %641 = vmatprep.subr.mxu0 0.0
    %642 = vmatpush1.msra.mxu0 %v314
    %643 = vmatprep.subr.mxu0 0.0
    %644 = vmatpush1.msra.mxu0 %v315
    %645 = vmatprep.subr.mxu0 0.0
    %646 = vmatpush1.msra.mxu0 %v316
    %647 = vmatprep.subr.mxu0 0.0
    %648 = vmatpush1.msra.mxu0 %v317
    %649 = vmatprep.subr.mxu0 0.0
    %650 = vmatpush1.msra.mxu0 %v318
    %651 = vmatprep.subr.mxu0 0.0
    %652 = vmatpush1.msra.mxu0 %v319
    %653 = vmatprep.subr.mxu0 0.0
    %654 = vmatpush1.msra.mxu0 %v320
    %655 = vmatprep.subr.mxu0 0.0
    %656 = vmatpush1.msra.mxu0 %v321
    %657 = vmatprep.subr.mxu0 0.0
    %658 = vmatpush1.msra.mxu0 0.0
    %659 = vmatprep.subr.mxu0 0.0
    %660 = vmatpush1.msra.mxu0 0.0
    %661 = vmatprep.subr.mxu0 0.0
    %662 = vmatpush1.msra.mxu0 0.0
    %663 = vmatprep.subr.mxu0 0.0
    %664 = vmatpush1.msra.mxu0 0.0
    %665 = vmatprep.subr.mxu0 0.0
    %666 = vmatpush1.msra.mxu0 0.0
    %667 = vmatprep.subr.mxu0 0.0
    %668 = vmatpush1.msra.mxu0 0.0
    %669 = vmatprep.subr.mxu0 0.0
    %670 = vmatpush1.msra.mxu0 0.0
    %671 = vmatprep.subr.mxu0 0.0
    %672 = vmatpush1.msra.mxu0 0.0
    %673 = vmatprep.subr.mxu0 0.0
    %674 = vmatpush1.msra.mxu0 0.0
    %675 = vmatprep.subr.mxu0 0.0
    %676 = vmatpush1.msra.mxu0 0.0
    %677 = vmatprep.subr.mxu0 0.0
    %678 = vmatpush1.msra.mxu0 0.0
    %679 = vmatprep.subr.mxu0 0.0
    %680 = vmatpush1.msra.mxu0 0.0
    %681 = vmatprep.subr.mxu0 0.0
    %682 = vmatpush1.msra.mxu0 0.0
    %683 = vmatprep.subr.mxu0 0.0
    %684 = vmatpush1.msra.mxu0 0.0
    %685 = vmatprep.subr.mxu0 0.0
    %686 = vmatpush1.msra.mxu0 0.0
    %687 = vmatprep.subr.mxu0 0.0
    %688 = vmatpush1.msra.mxu0 0.0
    %689 = vmatprep.mubr.f32.mxu0 0.0
    %690 = vmatmul.mubr.f32.gmra.mrb[0].mxu0 %v623
    %v691 = vpop.f32.mrb[0].mxu0
    %v692 = vadd.f32 0.0, %v691
    %v693 = vpop.f32.mrb[0].mxu0
    %694 = vdwg.mxu0
    %v695 = vadd.f32 %v302, %v692
    %v696 = vadd.f32 %v695, %v398
    %v697 = vtanh.pop %v696
    %698 = vst [vmem:[#allocation5 + $0x20] sm:$0xff] %v697
    %699 = vmatprep.subr.mxu0 0.0
    %700 = vmatpush1.msra.mxu0 %v306
    %701 = vmatprep.subr.mxu0 0.0
    %702 = vmatpush1.msra.mxu0 %v307
    %703 = vmatprep.subr.mxu0 0.0
    %704 = vmatpush1.msra.mxu0 %v308
    %705 = vmatprep.subr.mxu0 0.0
    %706 = vmatpush1.msra.mxu0 %v309
    %707 = vmatprep.subr.mxu0 0.0
    %708 = vmatpush1.msra.mxu0 %v310
    %709 = vmatprep.subr.mxu0 0.0
    %710 = vmatpush1.msra.mxu0 %v311
    %711 = vmatprep.subr.mxu0 0.0
    %712 = vmatpush1.msra.mxu0 %v312
    %713 = vmatprep.subr.mxu0 0.0
    %714 = vmatpush1.msra.mxu0 %v313
    %715 = vmatprep.subr.mxu0 0.0
    %716 = vmatpush1.msra.mxu0 %v314
    %717 = vmatprep.subr.mxu0 0.0
    %718 = vmatpush1.msra.mxu0 %v315
    %719 = vmatprep.subr.mxu0 0.0
    %720 = vmatpush1.msra.mxu0 %v316
    %721 = vmatprep.subr.mxu0 0.0
    %722 = vmatpush1.msra.mxu0 %v317
    %723 = vmatprep.subr.mxu0 0.0
    %724 = vmatpush1.msra.mxu0 %v318
    %725 = vmatprep.subr.mxu0 0.0
    %726 = vmatpush1.msra.mxu0 %v319
    %727 = vmatprep.subr.mxu0 0.0
    %728 = vmatpush1.msra.mxu0 %v320
    %729 = vmatprep.subr.mxu0 0.0
    %730 = vmatpush1.msra.mxu0 %v321
    %731 = vmatprep.subr.mxu0 0.0
    %732 = vmatpush1.msra.mxu0 0.0
    %733 = vmatprep.subr.mxu0 0.0
    %734 = vmatpush1.msra.mxu0 0.0
    %735 = vmatprep.subr.mxu0 0.0
    %736 = vmatpush1.msra.mxu0 0.0
    %737 = vmatprep.subr.mxu0 0.0
    %738 = vmatpush1.msra.mxu0 0.0
    %739 = vmatprep.subr.mxu0 0.0
    %740 = vmatpush1.msra.mxu0 0.0
    %741 = vmatprep.subr.mxu0 0.0
    %742 = vmatpush1.msra.mxu0 0.0
    %743 = vmatprep.subr.mxu0 0.0
    %744 = vmatpush1.msra.mxu0 0.0
    %745 = vmatprep.subr.mxu0 0.0
    %746 = vmatpush1.msra.mxu0 0.0
    %747 = vmatprep.subr.mxu0 0.0
    %748 = vmatpush1.msra.mxu0 0.0
    %749 = vmatprep.subr.mxu0 0.0
    %750 = vmatpush1.msra.mxu0 0.0
    %751 = vmatprep.subr.mxu0 0.0
    %752 = vmatpush1.msra.mxu0 0.0
    %753 = vmatprep.subr.mxu0 0.0
    %754 = vmatpush1.msra.mxu0 0.0
    %755 = vmatprep.subr.mxu0 0.0
    %756 = vmatpush1.msra.mxu0 0.0
    %757 = vmatprep.subr.mxu0 0.0
    %758 = vmatpush1.msra.mxu0 0.0
    %759 = vmatprep.subr.mxu0 0.0
    %760 = vmatpush1.msra.mxu0 0.0
    %761 = vmatprep.subr.mxu0 0.0
    %762 = vmatpush1.msra.mxu0 0.0
    %763 = vmatprep.mubr.f32.mxu0 0.0
    %764 = vmatmul.mubr.f32.gmra.mrb[0].mxu0 %v697
    %v765 = vpop.f32.mrb[0].mxu0
    %v766 = vadd.f32 0.0, %v765
    %v767 = vpop.f32.mrb[0].mxu0
    %768 = vdwg.mxu0
    %v769 = vadd.f32 %v303, %v766
    %v770 = vadd.f32 %v769, %v398
    %v771 = vtanh.pop %v770
    %772 = vst [vmem:[#allocation5 + $0x28] sm:$0xff] %v771
    %773 = vmatprep.subr.mxu0 0.0
    %774 = vmatpush1.msra.mxu0 %v306
    %775 = vmatprep.subr.mxu0 0.0
    %776 = vmatpush1.msra.mxu0 %v307
    %777 = vmatprep.subr.mxu0 0.0
    %778 = vmatpush1.msra.mxu0 %v308
    %779 = vmatprep.subr.mxu0 0.0
    %780 = vmatpush1.msra.mxu0 %v309
    %781 = vmatprep.subr.mxu0 0.0
    %782 = vmatpush1.msra.mxu0 %v310
    %783 = vmatprep.subr.mxu0 0.0
    %784 = vmatpush1.msra.mxu0 %v311
    %785 = vmatprep.subr.mxu0 0.0
    %786 = vmatpush1.msra.mxu0 %v312
    %787 = vmatprep.subr.mxu0 0.0
    %788 = vmatpush1.msra.mxu0 %v313
    %789 = vmatprep.subr.mxu0 0.0
    %790 = vmatpush1.msra.mxu0 %v314
    %791 = vmatprep.subr.mxu0 0.0
    %792 = vmatpush1.msra.mxu0 %v315
    %793 = vmatprep.subr.mxu0 0.0
    %794 = vmatpush1.msra.mxu0 %v316
    %795 = vmatprep.subr.mxu0 0.0
    %796 = vmatpush1.msra.mxu0 %v317
    %797 = vmatprep.subr.mxu0 0.0
    %798 = vmatpush1.msra.mxu0 %v318
    %799 = vmatprep.subr.mxu0 0.0
    %800 = vmatpush1.msra.mxu0 %v319
    %801 = vmatprep.subr.mxu0 0.0
    %802 = vmatpush1.msra.mxu0 %v320
    %803 = vmatprep.subr.mxu0 0.0
    %804 = vmatpush1.msra.mxu0 %v321
    %805 = vmatprep.subr.mxu0 0.0
    %806 = vmatpush1.msra.mxu0 0.0
    %807 = vmatprep.subr.mxu0 0.0
    %808 = vmatpush1.msra.mxu0 0.0
    %809 = vmatprep.subr.mxu0 0.0
    %810 = vmatpush1.msra.mxu0 0.0
    %811 = vmatprep.subr.mxu0 0.0
    %812 = vmatpush1.msra.mxu0 0.0
    %813 = vmatprep.subr.mxu0 0.0
    %814 = vmatpush1.msra.mxu0 0.0
    %815 = vmatprep.subr.mxu0 0.0
    %816 = vmatpush1.msra.mxu0 0.0
    %817 = vmatprep.subr.mxu0 0.0
    %818 = vmatpush1.msra.mxu0 0.0
    %819 = vmatprep.subr.mxu0 0.0
    %820 = vmatpush1.msra.mxu0 0.0
    %821 = vmatprep.subr.mxu0 0.0
    %822 = vmatpush1.msra.mxu0 0.0
    %823 = vmatprep.subr.mxu0 0.0
    %824 = vmatpush1.msra.mxu0 0.0
    %825 = vmatprep.subr.mxu0 0.0
    %826 = vmatpush1.msra.mxu0 0.0
    %827 = vmatprep.subr.mxu0 0.0
    %828 = vmatpush1.msra.mxu0 0.0
    %829 = vmatprep.subr.mxu0 0.0
    %830 = vmatpush1.msra.mxu0 0.0
    %831 = vmatprep.subr.mxu0 0.0
    %832 = vmatpush1.msra.mxu0 0.0
    %833 = vmatprep.subr.mxu0 0.0
    %834 = vmatpush1.msra.mxu0 0.0
    %835 = vmatprep.subr.mxu0 0.0
    %836 = vmatpush1.msra.mxu0 0.0
    %837 = vmatprep.mubr.f32.mxu0 0.0
    %838 = vmatmul.mubr.f32.gmra.mrb[0].mxu0 %v771
    %v839 = vpop.f32.mrb[0].mxu0
    %v840 = vadd.f32 0.0, %v839
    %v841 = vpop.f32.mrb[0].mxu0
    %842 = vdwg.mxu0
    %v843 = vadd.f32 %v304, %v840
    %v844 = vadd.f32 %v843, %v398
    %v845 = vtanh.pop %v844
    %846 = vst [vmem:[#allocation5 + $0x30] sm:$0xff] %v845
    %847 = vmatprep.subr.mxu0 0.0
    %848 = vmatpush1.msra.mxu0 %v306
    %849 = vmatprep.subr.mxu0 0.0
    %850 = vmatpush1.msra.mxu0 %v307
    %851 = vmatprep.subr.mxu0 0.0
    %852 = vmatpush1.msra.mxu0 %v308
    %853 = vmatprep.subr.mxu0 0.0
    %854 = vmatpush1.msra.mxu0 %v309
    %855 = vmatprep.subr.mxu0 0.0
    %856 = vmatpush1.msra.mxu0 %v310
    %857 = vmatprep.subr.mxu0 0.0
    %858 = vmatpush1.msra.mxu0 %v311
    %859 = vmatprep.subr.mxu0 0.0
    %860 = vmatpush1.msra.mxu0 %v312
    %861 = vmatprep.subr.mxu0 0.0
    %862 = vmatpush1.msra.mxu0 %v313
    %863 = vmatprep.subr.mxu0 0.0
    %864 = vmatpush1.msra.mxu0 %v314
    %865 = vmatprep.subr.mxu0 0.0
    %866 = vmatpush1.msra.mxu0 %v315
    %867 = vmatprep.subr.mxu0 0.0
    %868 = vmatpush1.msra.mxu0 %v316
    %869 = vmatprep.subr.mxu0 0.0
    %870 = vmatpush1.msra.mxu0 %v317
    %871 = vmatprep.subr.mxu0 0.0
    %872 = vmatpush1.msra.mxu0 %v318
    %873 = vmatprep.subr.mxu0 0.0
    %874 = vmatpush1.msra.mxu0 %v319
    %875 = vmatprep.subr.mxu0 0.0
    %876 = vmatpush1.msra.mxu0 %v320
    %877 = vmatprep.subr.mxu0 0.0
    %878 = vmatpush1.msra.mxu0 %v321
    %879 = vmatprep.subr.mxu0 0.0
    %880 = vmatpush1.msra.mxu0 0.0
    %881 = vmatprep.subr.mxu0 0.0
    %882 = vmatpush1.msra.mxu0 0.0
    %883 = vmatprep.subr.mxu0 0.0
    %884 = vmatpush1.msra.mxu0 0.0
    %885 = vmatprep.subr.mxu0 0.0
    %886 = vmatpush1.msra.mxu0 0.0
    %887 = vmatprep.subr.mxu0 0.0
    %888 = vmatpush1.msra.mxu0 0.0
    %889 = vmatprep.subr.mxu0 0.0
    %890 = vmatpush1.msra.mxu0 0.0
    %891 = vmatprep.subr.mxu0 0.0
    %892 = vmatpush1.msra.mxu0 0.0
    %893 = vmatprep.subr.mxu0 0.0
    %894 = vmatpush1.msra.mxu0 0.0
    %895 = vmatprep.subr.mxu0 0.0
    %896 = vmatpush1.msra.mxu0 0.0
    %897 = vmatprep.subr.mxu0 0.0
    %898 = vmatpush1.msra.mxu0 0.0
    %899 = vmatprep.subr.mxu0 0.0
    %900 = vmatpush1.msra.mxu0 0.0
    %901 = vmatprep.subr.mxu0 0.0
    %902 = vmatpush1.msra.mxu0 0.0
    %903 = vmatprep.subr.mxu0 0.0
    %904 = vmatpush1.msra.mxu0 0.0
    %905 = vmatprep.subr.mxu0 0.0
    %906 = vmatpush1.msra.mxu0 0.0
    %907 = vmatprep.subr.mxu0 0.0
    %908 = vmatpush1.msra.mxu0 0.0
    %909 = vmatprep.subr.mxu0 0.0
    %910 = vmatpush1.msra.mxu0 0.0
    %911 = vmatprep.mubr.f32.mxu0 0.0
    %912 = vmatmul.mubr.f32.gmra.mrb[0].mxu0 %v845
    %v913 = vpop.f32.mrb[0].mxu0
    %v914 = vadd.f32 0.0, %v913
    %v915 = vpop.f32.mrb[0].mxu0
    %916 = vdwg.mxu0
    %v917 = vadd.f32 %v305, %v914
    %v918 = vadd.f32 %v917, %v398
    %v919 = vtanh.pop %v918
    %920 = vst [vmem:[#allocation5 + $0x38] sm:$0xff] %v919
    %v921 = vld [vmem:[#allocation5] sm:$0xff]
    %v922 = vld [vmem:[#allocation5 + $0x8] sm:$0xff]
    %v923 = vld [vmem:[#allocation5 + $0x10] sm:$0xff]
    %v924 = vld [vmem:[#allocation5 + $0x18] sm:$0xff]
    %v925 = vld [vmem:[#allocation5 + $0x20] sm:$0xff]
    %v926 = vld [vmem:[#allocation5 + $0x28] sm:$0xff]
    %v927 = vld [vmem:[#allocation5 + $0x30] sm:$0xff]
    %v928 = vld [vmem:[#allocation5 + $0x38] sm:$0xff]
    %v929 = vld [vmem:[%s7] sm:$0xff]
    %v930 = vld [vmem:[%s7 + $0x8] sm:$0xff]
    %v931 = vld [vmem:[%s7 + $0x10] sm:$0xff]
    %v932 = vld [vmem:[%s7 + $0x18] sm:$0xff]
    %v933 = vld [vmem:[%s7 + $0x20] sm:$0xff]
    %v934 = vld [vmem:[%s7 + $0x28] sm:$0xff]
    %v935 = vld [vmem:[%s7 + $0x30] sm:$0xff]
    %v936 = vld [vmem:[%s7 + $0x38] sm:$0xff]
    %v937 = vld [vmem:[%s7 + $0x40] sm:$0xff]
    %v938 = vld [vmem:[%s7 + $0x48] sm:$0xff]
    %v939 = vld [vmem:[%s7 + $0x50] sm:$0xff]
    %v940 = vld [vmem:[%s7 + $0x58] sm:$0xff]
    %v941 = vld [vmem:[%s7 + $0x60] sm:$0xff]
    %v942 = vld [vmem:[%s7 + $0x68] sm:$0xff]
    %v943 = vld [vmem:[%s7 + $0x70] sm:$0xff]
    %v944 = vld [vmem:[%s7 + $0x78] sm:$0xff]
    %v945 = vld [vmem:[%s8] sm:$0x1]
    %v947 = vlaneseq
    %v948 = vshrl.u32 %v947, 7
    %v949 = vsub.s32 0, %v948
    %v950 = vrot.slane %v945, %v949
    %952 = vmatprep.subr.mxu0 0.0
    %953 = vmatpush1.msra.mxu0 %v929
    %954 = vmatprep.subr.mxu0 0.0
    %955 = vmatpush1.msra.mxu0 %v930
    %956 = vmatprep.subr.mxu0 0.0
    %957 = vmatpush1.msra.mxu0 %v931
    %958 = vmatprep.subr.mxu0 0.0
    %959 = vmatpush1.msra.mxu0 %v932
    %960 = vmatprep.subr.mxu0 0.0
    %961 = vmatpush1.msra.mxu0 %v933
    %962 = vmatprep.subr.mxu0 0.0
    %963 = vmatpush1.msra.mxu0 %v934
    %964 = vmatprep.subr.mxu0 0.0
    %965 = vmatpush1.msra.mxu0 %v935
    %966 = vmatprep.subr.mxu0 0.0
    %967 = vmatpush1.msra.mxu0 %v936
    %968 = vmatprep.subr.mxu0 0.0
    %969 = vmatpush1.msra.mxu0 %v937
    %970 = vmatprep.subr.mxu0 0.0
    %971 = vmatpush1.msra.mxu0 %v938
    %972 = vmatprep.subr.mxu0 0.0
    %973 = vmatpush1.msra.mxu0 %v939
    %974 = vmatprep.subr.mxu0 0.0
    %975 = vmatpush1.msra.mxu0 %v940
    %976 = vmatprep.subr.mxu0 0.0
    %977 = vmatpush1.msra.mxu0 %v941
    %978 = vmatprep.subr.mxu0 0.0
    %979 = vmatpush1.msra.mxu0 %v942
    %980 = vmatprep.subr.mxu0 0.0
    %981 = vmatpush1.msra.mxu0 %v943
    %982 = vmatprep.subr.mxu0 0.0
    %983 = vmatpush1.msra.mxu0 %v944
    %984 = vmatprep.subr.mxu0 0.0
    %985 = vmatpush1.msra.mxu0 0.0
    %986 = vmatprep.subr.mxu0 0.0
    %987 = vmatpush1.msra.mxu0 0.0
    %988 = vmatprep.subr.mxu0 0.0
    %989 = vmatpush1.msra.mxu0 0.0
    %990 = vmatprep.subr.mxu0 0.0
    %991 = vmatpush1.msra.mxu0 0.0
    %992 = vmatprep.subr.mxu0 0.0
    %993 = vmatpush1.msra.mxu0 0.0
    %994 = vmatprep.subr.mxu0 0.0
    %995 = vmatpush1.msra.mxu0 0.0
    %996 = vmatprep.subr.mxu0 0.0
    %997 = vmatpush1.msra.mxu0 0.0
    %998 = vmatprep.subr.mxu0 0.0
    %999 = vmatpush1.msra.mxu0 0.0
    %1000 = vmatprep.subr.mxu0 0.0
    %1001 = vmatpush1.msra.mxu0 0.0
    %1002 = vmatprep.subr.mxu0 0.0
    %1003 = vmatpush1.msra.mxu0 0.0
    %1004 = vmatprep.subr.mxu0 0.0
    %1005 = vmatpush1.msra.mxu0 0.0
    %1006 = vmatprep.subr.mxu0 0.0
    %1007 = vmatpush1.msra.mxu0 0.0
    %1008 = vmatprep.subr.mxu0 0.0
    %1009 = vmatpush1.msra.mxu0 0.0
    %1010 = vmatprep.subr.mxu0 0.0
    %1011 = vmatpush1.msra.mxu0 0.0
    %1012 = vmatprep.subr.mxu0 0.0
    %1013 = vmatpush1.msra.mxu0 0.0
    %1014 = vmatprep.subr.mxu0 0.0
    %1015 = vmatpush1.msra.mxu0 0.0
    %1016 = vmatprep.mubr.f32.mxu0 0.0
    %1017 = vmatmul.mubr.f32.gmra.mrb[0].mxu0 %v921
    %v1018 = vpop.f32.mrb[0].mxu0
    %v1019 = vadd.f32 %v950, %v1018
    %v1020 = vpop.f32.mrb[0].mxu0
    %1021 = vmatprep.mubr.f32.mxu0 0.0
    %1022 = vmatmul.mubr.f32.gmra.mrb[0].mxu0 %v922
    %v1023 = vpop.f32.mrb[0].mxu0
    %v1024 = vadd.f32 %v950, %v1023
    %v1025 = vpop.f32.mrb[0].mxu0
    %1026 = vmatprep.mubr.f32.mxu0 0.0
    %1027 = vmatmul.mubr.f32.gmra.mrb[0].mxu0 %v923
    %v1028 = vpop.f32.mrb[0].mxu0
    %v1029 = vadd.f32 %v950, %v1028
    %v1030 = vpop.f32.mrb[0].mxu0
    %1031 = vmatprep.mubr.f32.mxu0 0.0
    %1032 = vmatmul.mubr.f32.gmra.mrb[0].mxu0 %v924
    %v1033 = vpop.f32.mrb[0].mxu0
    %v1034 = vadd.f32 %v950, %v1033
    %v1035 = vpop.f32.mrb[0].mxu0
    %1036 = vmatprep.mubr.f32.mxu0 0.0
    %1037 = vmatmul.mubr.f32.gmra.mrb[0].mxu0 %v925
    %v1038 = vpop.f32.mrb[0].mxu0
    %v1039 = vadd.f32 %v950, %v1038
    %v1040 = vpop.f32.mrb[0].mxu0
    %1041 = vmatprep.mubr.f32.mxu0 0.0
    %1042 = vmatmul.mubr.f32.gmra.mrb[0].mxu0 %v926
    %v1043 = vpop.f32.mrb[0].mxu0
    %v1044 = vadd.f32 %v950, %v1043
    %v1045 = vpop.f32.mrb[0].mxu0
    %1046 = vmatprep.mubr.f32.mxu0 0.0
    %1047 = vmatmul.mubr.f32.gmra.mrb[0].mxu0 %v927
    %v1048 = vpop.f32.mrb[0].mxu0
    %v1049 = vadd.f32 %v950, %v1048
    %v1050 = vpop.f32.mrb[0].mxu0
    %1051 = vmatprep.mubr.f32.mxu0 0.0
    %1052 = vmatmul.mubr.f32.gmra.mrb[0].mxu0 %v928
    %v1053 = vpop.f32.mrb[0].mxu0
    %v1054 = vadd.f32 %v950, %v1053
    %v1055 = vpop.f32.mrb[0].mxu0
    %1056 = vdwg.mxu0
    %vm1057 = vcmask 15360
    %v1058 = vsel %vm1057, %v1019, -inf
    %1059 = vmax.xlane.f32.xlu0 %v1058
    %v1060 = vpop.xlane.xlu0 %1059
    %v1061 = vsel %vm1057, %v1024, -inf
    %1062 = vmax.xlane.f32.xlu0 %v1061
    %v1063 = vpop.xlane.xlu0 %1062
    %v1064 = vsel %vm1057, %v1029, -inf
    %1065 = vmax.xlane.f32.xlu0 %v1064
    %v1066 = vpop.xlane.xlu0 %1065
    %v1067 = vsel %vm1057, %v1034, -inf
    %1068 = vmax.xlane.f32.xlu0 %v1067
    %v1069 = vpop.xlane.xlu0 %1068
    %v1070 = vsel %vm1057, %v1039, -inf
    %1071 = vmax.xlane.f32.xlu0 %v1070
    %v1072 = vpop.xlane.xlu0 %1071
    %v1073 = vsel %vm1057, %v1044, -inf
    %1074 = vmax.xlane.f32.xlu0 %v1073
    %v1075 = vpop.xlane.xlu0 %1074
    %v1076 = vsel %vm1057, %v1049, -inf
    %1077 = vmax.xlane.f32.xlu0 %v1076
    %v1078 = vpop.xlane.xlu0 %1077
    %v1079 = vsel %vm1057, %v1054, -inf
    %1080 = vmax.xlane.f32.xlu0 %v1079
    %v1081 = vpop.xlane.xlu0 %1080
    %v1082 = vsub.f32 %v1019, %v1060
    %v1083 = vsub.f32 %v1024, %v1063
    %v1084 = vsub.f32 %v1029, %v1066
    %v1085 = vsub.f32 %v1034, %v1069
    %v1086 = vsub.f32 %v1039, %v1072
    %v1087 = vsub.f32 %v1044, %v1075
    %v1088 = vsub.f32 %v1049, %v1078
    %v1089 = vsub.f32 %v1054, %v1081
    %v1090 = vmul.f32 %v1082, 1.442695
    %v1091 = vpow.pop %v1090
    %v1092 = vmul.f32 %v1083, 1.442695
    %v1093 = vpow.pop %v1092
    %v1094 = vmul.f32 %v1084, 1.442695
    %v1095 = vpow.pop %v1094
    %v1096 = vmul.f32 %v1085, 1.442695
    %v1097 = vpow.pop %v1096
    %v1098 = vmul.f32 %v1086, 1.442695
    %v1099 = vpow.pop %v1098
    %v1100 = vmul.f32 %v1087, 1.442695
    %v1101 = vpow.pop %v1100
    %v1102 = vmul.f32 %v1088, 1.442695
    %v1103 = vpow.pop %v1102
    %v1104 = vmul.f32 %v1089, 1.442695
    %v1105 = vpow.pop %v1104
    %v1106 = vsel %vm1057, %v1091, 0.0
    %1107 = vadd.xlane.f32.xlu0 %v1106
    %v1108 = vpop.xlane.xlu0 %1107
    %v1109 = vsel %vm1057, %v1093, 0.0
    %1110 = vadd.xlane.f32.xlu0 %v1109
    %v1111 = vpop.xlane.xlu0 %1110
    %v1112 = vsel %vm1057, %v1095, 0.0
    %1113 = vadd.xlane.f32.xlu0 %v1112
    %v1114 = vpop.xlane.xlu0 %1113
    %v1115 = vsel %vm1057, %v1097, 0.0
    %1116 = vadd.xlane.f32.xlu0 %v1115
    %v1117 = vpop.xlane.xlu0 %1116
    %v1118 = vsel %vm1057, %v1099, 0.0
    %1119 = vadd.xlane.f32.xlu0 %v1118
    %v1120 = vpop.xlane.xlu0 %1119
    %v1121 = vsel %vm1057, %v1101, 0.0
    %1122 = vadd.xlane.f32.xlu0 %v1121
    %v1123 = vpop.xlane.xlu0 %1122
    %v1124 = vsel %vm1057, %v1103, 0.0
    %1125 = vadd.xlane.f32.xlu0 %v1124
    %v1126 = vpop.xlane.xlu0 %1125
    %v1127 = vsel %vm1057, %v1105, 0.0
    %1128 = vadd.xlane.f32.xlu0 %v1127
    %v1129 = vpop.xlane.xlu0 %1128
    %v1130 = vrcp.pop %v1108
    %v1131 = vmul.f32 %v1091, %v1130
    %v1132 = vrcp.pop %v1111
    %v1133 = vmul.f32 %v1093, %v1132
    %v1134 = vrcp.pop %v1114
    %v1135 = vmul.f32 %v1095, %v1134
    %v1136 = vrcp.pop %v1117
    %v1137 = vmul.f32 %v1097, %v1136
    %v1138 = vrcp.pop %v1120
    %v1139 = vmul.f32 %v1099, %v1138
    %v1140 = vrcp.pop %v1123
    %v1141 = vmul.f32 %v1101, %v1140
    %v1142 = vrcp.pop %v1126
    %v1143 = vmul.f32 %v1103, %v1142
    %v1144 = vrcp.pop %v1129
    %v1145 = vmul.f32 %v1105, %v1144
    %vm1146 = vcmask 31760
    %v1147 = vsel %vm1146, %v1019, -inf
    %1148 = vmax.xlane.f32.xlu0 %v1147
    %v1149 = vpop.xlane.xlu0 %1148
    %v1150 = vsel %vm1146, %v1024, -inf
    %1151 = vmax.xlane.f32.xlu0 %v1150
    %v1152 = vpop.xlane.xlu0 %1151
    %v1153 = vsel %vm1146, %v1029, -inf
    %1154 = vmax.xlane.f32.xlu0 %v1153
    %v1155 = vpop.xlane.xlu0 %1154
    %v1156 = vsel %vm1146, %v1034, -inf
    %1157 = vmax.xlane.f32.xlu0 %v1156
    %v1158 = vpop.xlane.xlu0 %1157
    %v1159 = vsel %vm1146, %v1039, -inf
    %1160 = vmax.xlane.f32.xlu0 %v1159
    %v1161 = vpop.xlane.xlu0 %1160
    %v1162 = vsel %vm1146, %v1044, -inf
    %1163 = vmax.xlane.f32.xlu0 %v1162
    %v1164 = vpop.xlane.xlu0 %1163
    %v1165 = vsel %vm1146, %v1049, -inf
    %1166 = vmax.xlane.f32.xlu0 %v1165
    %v1167 = vpop.xlane.xlu0 %1166
    %v1168 = vsel %vm1146, %v1054, -inf
    %1169 = vmax.xlane.f32.xlu0 %v1168
    %v1170 = vpop.xlane.xlu0 %1169
    %v1171 = vsub.f32 %v1019, %v1149
    %v1172 = vsub.f32 %v1024, %v1152
    %v1173 = vsub.f32 %v1029, %v1155
    %v1174 = vsub.f32 %v1034, %v1158
    %v1175 = vsub.f32 %v1039, %v1161
    %v1176 = vsub.f32 %v1044, %v1164
    %v1177 = vsub.f32 %v1049, %v1167
    %v1178 = vsub.f32 %v1054, %v1170
    %v1179 = vmul.f32 %v1171, 1.442695
    %v1180 = vpow.pop %v1179
    %v1181 = vmul.f32 %v1172, 1.442695
    %v1182 = vpow.pop %v1181
    %v1183 = vmul.f32 %v1173, 1.442695
    %v1184 = vpow.pop %v1183
    %v1185 = vmul.f32 %v1174, 1.442695
    %v1186 = vpow.pop %v1185
    %v1187 = vmul.f32 %v1175, 1.442695
    %v1188 = vpow.pop %v1187
    %v1189 = vmul.f32 %v1176, 1.442695
    %v1190 = vpow.pop %v1189
    %v1191 = vmul.f32 %v1177, 1.442695
    %v1192 = vpow.pop %v1191
    %v1193 = vmul.f32 %v1178, 1.442695
    %v1194 = vpow.pop %v1193
    %1203 = vrot.lane.b32.xlu0 %v1180, 126
    %v1204 = vpop.permute.xlu0 %1203
    %1205 = vrot.lane.b32.xlu0 %v1182, 126
    %v1206 = vpop.permute.xlu0 %1205
    %1207 = vrot.lane.b32.xlu0 %v1184, 126
    %v1208 = vpop.permute.xlu0 %1207
    %1209 = vrot.lane.b32.xlu0 %v1186, 126
    %v1210 = vpop.permute.xlu0 %1209
    %1211 = vrot.lane.b32.xlu0 %v1188, 126
    %v1212 = vpop.permute.xlu0 %1211
    %1213 = vrot.lane.b32.xlu0 %v1190, 126
    %v1214 = vpop.permute.xlu0 %1213
    %1215 = vrot.lane.b32.xlu0 %v1192, 126
    %v1216 = vpop.permute.xlu0 %1215
    %1217 = vrot.lane.b32.xlu0 %v1194, 126
    %v1218 = vpop.permute.xlu0 %1217
    %v1227 = vsel %vm1057, %v1204, 0.0
    %1228 = vadd.xlane.f32.xlu0 %v1227
    %v1229 = vpop.xlane.xlu0 %1228
    %v1230 = vsel %vm1057, %v1206, 0.0
    %1231 = vadd.xlane.f32.xlu0 %v1230
    %v1232 = vpop.xlane.xlu0 %1231
    %v1233 = vsel %vm1057, %v1208, 0.0
    %1234 = vadd.xlane.f32.xlu0 %v1233
    %v1235 = vpop.xlane.xlu0 %1234
    %v1236 = vsel %vm1057, %v1210, 0.0
    %1237 = vadd.xlane.f32.xlu0 %v1236
    %v1238 = vpop.xlane.xlu0 %1237
    %v1239 = vsel %vm1057, %v1212, 0.0
    %1240 = vadd.xlane.f32.xlu0 %v1239
    %v1241 = vpop.xlane.xlu0 %1240
    %v1242 = vsel %vm1057, %v1214, 0.0
    %1243 = vadd.xlane.f32.xlu0 %v1242
    %v1244 = vpop.xlane.xlu0 %1243
    %v1245 = vsel %vm1057, %v1216, 0.0
    %1246 = vadd.xlane.f32.xlu0 %v1245
    %v1247 = vpop.xlane.xlu0 %1246
    %v1248 = vsel %vm1057, %v1218, 0.0
    %1249 = vadd.xlane.f32.xlu0 %v1248
    %v1250 = vpop.xlane.xlu0 %1249
    %v1251 = vrcp.pop %v1229
    %v1252 = vmul.f32 %v1180, %v1251
    %v1253 = vrcp.pop %v1232
    %v1254 = vmul.f32 %v1182, %v1253
    %v1255 = vrcp.pop %v1235
    %v1256 = vmul.f32 %v1184, %v1255
    %v1257 = vrcp.pop %v1238
    %v1258 = vmul.f32 %v1186, %v1257
    %v1259 = vrcp.pop %v1241
    %v1260 = vmul.f32 %v1188, %v1259
    %v1261 = vrcp.pop %v1244
    %v1262 = vmul.f32 %v1190, %v1261
    %v1263 = vrcp.pop %v1247
    %v1264 = vmul.f32 %v1192, %v1263
    %v1265 = vrcp.pop %v1250
    %v1266 = vmul.f32 %v1194, %v1265
    %vm1267 = vcmask 48160
    %v1268 = vsel %vm1267, %v1019, -inf
    %1269 = vmax.xlane.f32.xlu0 %v1268
    %v1270 = vpop.xlane.xlu0 %1269
    %v1271 = vsel %vm1267, %v1024, -inf
    %1272 = vmax.xlane.f32.xlu0 %v1271
    %v1273 = vpop.xlane.xlu0 %1272
    %v1274 = vsel %vm1267, %v1029, -inf
    %1275 = vmax.xlane.f32.xlu0 %v1274
    %v1276 = vpop.xlane.xlu0 %1275
    %v1277 = vsel %vm1267, %v1034, -inf
    %1278 = vmax.xlane.f32.xlu0 %v1277
    %v1279 = vpop.xlane.xlu0 %1278
    %v1280 = vsel %vm1267, %v1039, -inf
    %1281 = vmax.xlane.f32.xlu0 %v1280
    %v1282 = vpop.xlane.xlu0 %1281
    %v1283 = vsel %vm1267, %v1044, -inf
    %1284 = vmax.xlane.f32.xlu0 %v1283
    %v1285 = vpop.xlane.xlu0 %1284
    %v1286 = vsel %vm1267, %v1049, -inf
    %1287 = vmax.xlane.f32.xlu0 %v1286
    %v1288 = vpop.xlane.xlu0 %1287
    %v1289 = vsel %vm1267, %v1054, -inf
    %1290 = vmax.xlane.f32.xlu0 %v1289
    %v1291 = vpop.xlane.xlu0 %1290
    %v1292 = vsub.f32 %v1019, %v1270
    %v1293 = vsub.f32 %v1024, %v1273
    %v1294 = vsub.f32 %v1029, %v1276
    %v1295 = vsub.f32 %v1034, %v1279
    %v1296 = vsub.f32 %v1039, %v1282
    %v1297 = vsub.f32 %v1044, %v1285
    %v1298 = vsub.f32 %v1049, %v1288
    %v1299 = vsub.f32 %v1054, %v1291
    %v1300 = vmul.f32 %v1292, 1.442695
    %v1301 = vpow.pop %v1300
    %v1302 = vmul.f32 %v1293, 1.442695
    %v1303 = vpow.pop %v1302
    %v1304 = vmul.f32 %v1294, 1.442695
    %v1305 = vpow.pop %v1304
    %v1306 = vmul.f32 %v1295, 1.442695
    %v1307 = vpow.pop %v1306
    %v1308 = vmul.f32 %v1296, 1.442695
    %v1309 = vpow.pop %v1308
    %v1310 = vmul.f32 %v1297, 1.442695
    %v1311 = vpow.pop %v1310
    %v1312 = vmul.f32 %v1298, 1.442695
    %v1313 = vpow.pop %v1312
    %v1314 = vmul.f32 %v1299, 1.442695
    %v1315 = vpow.pop %v1314
    %1324 = vrot.lane.b32.xlu0 %v1301, 124
    %v1325 = vpop.permute.xlu0 %1324
    %1326 = vrot.lane.b32.xlu0 %v1303, 124
    %v1327 = vpop.permute.xlu0 %1326
    %1328 = vrot.lane.b32.xlu0 %v1305, 124
    %v1329 = vpop.permute.xlu0 %1328
    %1330 = vrot.lane.b32.xlu0 %v1307, 124
    %v1331 = vpop.permute.xlu0 %1330
    %1332 = vrot.lane.b32.xlu0 %v1309, 124
    %v1333 = vpop.permute.xlu0 %1332
    %1334 = vrot.lane.b32.xlu0 %v1311, 124
    %v1335 = vpop.permute.xlu0 %1334
    %1336 = vrot.lane.b32.xlu0 %v1313, 124
    %v1337 = vpop.permute.xlu0 %1336
    %1338 = vrot.lane.b32.xlu0 %v1315, 124
    %v1339 = vpop.permute.xlu0 %1338
    %v1348 = vsel %vm1057, %v1325, 0.0
    %1349 = vadd.xlane.f32.xlu0 %v1348
    %v1350 = vpop.xlane.xlu0 %1349
    %v1351 = vsel %vm1057, %v1327, 0.0
    %1352 = vadd.xlane.f32.xlu0 %v1351
    %v1353 = vpop.xlane.xlu0 %1352
    %v1354 = vsel %vm1057, %v1329, 0.0
    %1355 = vadd.xlane.f32.xlu0 %v1354
    %v1356 = vpop.xlane.xlu0 %1355
    %v1357 = vsel %vm1057, %v1331, 0.0
    %1358 = vadd.xlane.f32.xlu0 %v1357
    %v1359 = vpop.xlane.xlu0 %1358
    %v1360 = vsel %vm1057, %v1333, 0.0
    %1361 = vadd.xlane.f32.xlu0 %v1360
    %v1362 = vpop.xlane.xlu0 %1361
    %v1363 = vsel %vm1057, %v1335, 0.0
    %1364 = vadd.xlane.f32.xlu0 %v1363
    %v1365 = vpop.xlane.xlu0 %1364
    %v1366 = vsel %vm1057, %v1337, 0.0
    %1367 = vadd.xlane.f32.xlu0 %v1366
    %v1368 = vpop.xlane.xlu0 %1367
    %v1369 = vsel %vm1057, %v1339, 0.0
    %1370 = vadd.xlane.f32.xlu0 %v1369
    %v1371 = vpop.xlane.xlu0 %1370
    %v1372 = vrcp.pop %v1350
    %v1373 = vmul.f32 %v1301, %v1372
    %v1374 = vrcp.pop %v1353
    %v1375 = vmul.f32 %v1303, %v1374
    %v1376 = vrcp.pop %v1356
    %v1377 = vmul.f32 %v1305, %v1376
    %v1378 = vrcp.pop %v1359
    %v1379 = vmul.f32 %v1307, %v1378
    %v1380 = vrcp.pop %v1362
    %v1381 = vmul.f32 %v1309, %v1380
    %v1382 = vrcp.pop %v1365
    %v1383 = vmul.f32 %v1311, %v1382
    %v1384 = vrcp.pop %v1368
    %v1385 = vmul.f32 %v1313, %v1384
    %v1386 = vrcp.pop %v1371
    %v1387 = vmul.f32 %v1315, %v1386
    %v1388 = vsel %vm1057, %v1131, %v1252
    %v1389 = vsel %vm1057, %v1133, %v1254
    %v1390 = vsel %vm1057, %v1135, %v1256
    %v1391 = vsel %vm1057, %v1137, %v1258
    %v1392 = vsel %vm1057, %v1139, %v1260
    %v1393 = vsel %vm1057, %v1141, %v1262
    %v1394 = vsel %vm1057, %v1143, %v1264
    %v1395 = vsel %vm1057, %v1145, %v1266
    %vm1396 = vcmask 31744
    %v1397 = vsel %vm1396, %v1388, %v1373
    %v1398 = vsel %vm1396, %v1389, %v1375
    %v1399 = vsel %vm1396, %v1390, %v1377
    %v1400 = vsel %vm1396, %v1391, %v1379
    %v1401 = vsel %vm1396, %v1392, %v1381
    %v1402 = vsel %vm1396, %v1393, %v1383
    %v1403 = vsel %vm1396, %v1394, %v1385
    %v1404 = vsel %vm1396, %v1395, %v1387
    %vm1405 = vcmask 48128
    %1406 = vst.msk [vmem:[%s10] sm:$0xff] %vm1405, %v1397
    %1407 = vst.msk [vmem:[%s10 + $0x8] sm:$0xff] %vm1405, %v1398
    %1408 = vst.msk [vmem:[%s10 + $0x10] sm:$0xff] %vm1405, %v1399
    %1409 = vst.msk [vmem:[%s10 + $0x18] sm:$0xff] %vm1405, %v1400
    %1410 = vst.msk [vmem:[%s10 + $0x20] sm:$0xff] %vm1405, %v1401
    %1411 = vst.msk [vmem:[%s10 + $0x28] sm:$0xff] %vm1405, %v1402
    %1412 = vst.msk [vmem:[%s10 + $0x30] sm:$0xff] %vm1405, %v1403
    %1413 = vst.msk [vmem:[%s10 + $0x38] sm:$0xff] %vm1405, %v1404
    // Predicated region
    $region42: #{tpu_custom_call.1} parent=1 // pred_check
      _
    $region43: #{tpu_custom_call.1} parent=1 // pred_check_branch
      %1415 = sbr.rel (0) target = $region45
    $region44: #{tpu_custom_call.1} parent=1 // pred_region
      %s1417 = ssub.s32 1024, 1024
      %1418 = vsyncadd [#allocation4], %s1417
      %s1419 = sshll.u32 [#allocation5], 4
      %s1420 = int_to_ptr.vmem [resolvable:$true] %s1419
      %1425 = dma.vmem_to_hbm [thread:$0]  %s1420, 1024, %s9, [#allocation4], 128, 128, 8
    $region45: #{tpu_custom_call.1} parent=1 // pred_fallthru
      _
    // Predicated region
    $region46: #{tpu_custom_call.1} parent=1 // pred_check
      _
    $region47: #{tpu_custom_call.1} parent=1 // pred_check_branch
      %1427 = sbr.rel (0) target = $region49
    $region48: #{tpu_custom_call.1} parent=1 // pred_region
      _
    $region49: #{tpu_custom_call.1} parent=1 // pred_fallthru
      _
    // Predicated region
    $region50: #{tpu_custom_call.1} parent=1 // pred_check
      _
    $region51: #{tpu_custom_call.1} parent=1 // pred_check_branch
      %1429 = sbr.rel (0) target = $region53
    $region52: #{tpu_custom_call.1} parent=1 // pred_region
      %1430 = dma.done [#allocation4], 1024
    $region53: #{tpu_custom_call.1} parent=1 // pred_fallthru
      _
    // Predicated region
    $region54: #{tpu_custom_call.1} parent=1 // pred_check
      _
    $region55: #{tpu_custom_call.1} parent=1 // pred_check_branch
      %1432 = sbr.rel (0) target = $region57
    $region56: #{tpu_custom_call.1} parent=1 // pred_region
      _
    $region57: #{tpu_custom_call.1} parent=1 // pred_fallthru
      _
    %1433 = vsyncpa [#allocation3], 1
    %1434 = vsyncpa [#allocation4], 1

</llo_original>
